<compile_context>
chip_gen: v7x
topology: tpu7x:2x2x1
jax: 0.10.0
libtpu: 0.0.40
codegen_flags: <defaults>
</compile_context>

<pallas_src>
import functools

import numpy as np
import jax
import jax.numpy as jnp
from jax.experimental import pallas as pl
from jax.experimental.pallas import tpu as pltpu


def _round_up(x, m):
    return ((x + m - 1) // m) * m


def _tpu_defaults():
    """(default dst-tile rows, vmem_limit_bytes) for the detected TPU."""
    vmem_cap = 64 * 1024 * 1024
    try:
        vmem_cap = int(pltpu.get_tpu_info().vmem_capacity_bytes)
    except Exception:                      # conservative (v7x-safe) fallback
        pass
    if vmem_cap >= 96 * 1024 * 1024:       # v5e / v6e: 128 MiB physical VMEM
        return 512, 100 * 1024 * 1024
    return 256, 52 * 1024 * 1024           # v7x (64 MiB) / unknown


def _gat_layer_kernel(asrc_ref, adst_ref, h_ref, adj_ref, bias_ref, out_ref, *,
                      heads, concat, activation, valid_out):
    """Attention + aggregation for one (dst-tile, head) grid point.

    asrc_ref: [1, 1, N]   f32   source logits for this head
    adst_ref: [1, T, 1]   f32   destination logits for this head / tile
    h_ref:    [H, N, C]   bf16  transformed features (resident, all heads)
    adj_ref:  [T, N]      int8  adjacency mask adj[dst, src] (self-loops set)
    bias_ref: [1, 1, C]   f32
    out_ref:  [1, T, C]   f32
    """
    hd = pl.program_id(1)

    a_src = asrc_ref[0]                          # [1, N]
    a_dst = adst_ref[0]                          # [T, 1]
    mask = adj_ref[...] != 0                     # [T, N] (VPU path only)

    # e[t, s] = LeakyReLU(alpha_dst[t] + alpha_src[s], slope=0.2), masked.
    e = a_dst + a_src                            # [T, N] f32
    e = jnp.maximum(e, 0.2 * e)
    e = jnp.where(mask, e, jnp.float32(-1e30))
    m = jnp.max(e, axis=-1, keepdims=True)       # [T, 1]
    # Masked entries underflow to exactly 0 (every real row has a self-loop),
    # so no second select is needed.  Padded rows produce finite garbage that
    # the wrapper slices off.
    p = jnp.exp(e - m)                           # [T, N] f32 (EUP)
    denom = jnp.sum(p, axis=-1, keepdims=True)   # [T, 1]  XLU row-sum

    acc = jnp.dot(p.astype(jnp.bfloat16), h_ref[hd],
                  preferred_element_type=jnp.float32)          # [T, C] MXU
    inv = pl.reciprocal(jnp.maximum(denom, jnp.float32(1e-20)), approx=True)
    head_out = acc * inv                         # [T, C] f32

    if concat:
        o = head_out + bias_ref[0]
        if activation == "elu":
            o = jnp.where(o > 0, o, jnp.exp(jnp.minimum(o, 0.0)) - 1.0)
        out_ref[0] = o
    else:
        # Mean over heads: accumulate into the (revisited) output block.
        @pl.when(hd == 0)
        def _init():
            out_ref[0] = head_out

        @pl.when(hd > 0)
        def _accumulate():
            out_ref[0] = out_ref[0] + head_out

        @pl.when(hd == pl.num_programs(1) - 1)
        def _finalize():
            o = out_ref[0] * jnp.float32(1.0 / heads) + bias_ref[0]
            if activation == "elu":
                o = jnp.where(o > 0, o, jnp.exp(jnp.minimum(o, 0.0)) - 1.0)
            elif activation == "log_softmax":
                if valid_out < o.shape[-1]:      # mask lane-padded channels
                    lane = jax.lax.broadcasted_iota(jnp.int32, o.shape, 1)
                    o = jnp.where(lane < valid_out, o, jnp.float32(-1e30))
                mrow = jnp.max(o, axis=-1, keepdims=True)
                z = o - mrow
                lse = jnp.log(jnp.sum(jnp.exp(z), axis=-1, keepdims=True))
                o = z - lse
            out_ref[0] = o


def gat_layer(x_p, w, att_src, att_dst, adj_p, bias, *, heads, out_per_head,
              concat, activation, tile_rows, vmem_limit_bytes):
    """One GATConv layer (+ fused activation) in zero-padded node space.

    x_p:   [n_pad, F] node features (padded rows are zero / ignored)
    adj_p: [n_pad, n_pad] int8 adj[dst, src] incl. self-loops
    Returns [n_pad, heads*C] (concat) or [n_pad, C] (mean over heads).
    """
    n_pad, f_in = x_p.shape
    t = tile_rows
    assert n_pad % t == 0
    C = out_per_head

    # Lane-dense output channels for non-concat layers (unmasked full-lane vst).
    if (not concat) and (C % 128 != 0):
        c_pad = _round_up(C, 128)
        pad = c_pad - C
        w = jnp.pad(w.reshape(f_in, heads, C), ((0, 0), (0, 0), (0, pad)))
        w = w.reshape(f_in, heads * c_pad)
        att_src = jnp.pad(att_src, ((0, 0), (0, pad)))
        att_dst = jnp.pad(att_dst, ((0, 0), (0, pad)))
        bias = jnp.pad(bias, (0, pad))
    else:
        c_pad = C

    # ---- hoisted per-layer compute (runs ONCE, plain XLA) -------------------
    h = jnp.dot(x_p.astype(jnp.bfloat16), w.astype(jnp.bfloat16),
                preferred_element_type=jnp.float32)             # [n_pad, H*c]
    h = h.reshape(n_pad, heads, c_pad)                           # [n_pad, H, c]
    alpha_src = jnp.einsum('nhc,hc->hn', h, att_src.astype(jnp.float32))
    alpha_dst = jnp.einsum('nhc,hc->hn', h, att_dst.astype(jnp.float32))
    h_bf = jnp.transpose(h, (1, 0, 2)).astype(jnp.bfloat16)      # [H, n_pad, c]
    asrc = alpha_src[:, None, :]                                 # [H, 1, n_pad]
    adst = alpha_dst[:, :, None]                                 # [H, n_pad, 1]
    n_bias_heads = heads if concat else 1
    bias3 = bias.reshape(n_bias_heads, 1, c_pad).astype(jnp.float32)
    n_out_heads = heads if concat else 1

    kernel = functools.partial(_gat_layer_kernel, heads=heads, concat=concat,
                               activation=activation, valid_out=C)

    bias_map = (lambda i, hd: (hd, 0, 0)) if concat else (lambda i, hd: (0, 0, 0))
    out_map = (lambda i, hd: (hd, i, 0)) if concat else (lambda i, hd: (0, i, 0))

    out = pl.pallas_call(
        kernel,
        out_shape=jax.ShapeDtypeStruct((n_out_heads, n_pad, c_pad), jnp.float32),
        grid=(n_pad // t, heads),
        in_specs=[
            pl.BlockSpec((1, 1, n_pad), lambda i, hd: (hd, 0, 0)),         # alpha_src
            pl.BlockSpec((1, t, 1), lambda i, hd: (hd, i, 0)),             # alpha_dst
            pl.BlockSpec((heads, n_pad, c_pad), lambda i, hd: (0, 0, 0)),  # h (resident)
            pl.BlockSpec((t, n_pad), lambda i, hd: (i, 0)),                # adj tile (int8)
            pl.BlockSpec((1, 1, c_pad), bias_map),                         # bias
        ],
        out_specs=pl.BlockSpec((1, t, c_pad), out_map),
        compiler_params=pltpu.CompilerParams(
            dimension_semantics=("parallel", "arbitrary"),
            vmem_limit_bytes=vmem_limit_bytes),
    )(asrc, adst, h_bf, adj_p, bias3)

    if concat:
        # [H, n_pad, C] -> [n_pad, H*C]  (PyG concat layout)
        return jnp.transpose(out, (1, 0, 2)).reshape(n_pad, heads * c_pad)
    return out[0, :, :C]


def _glorot(key, shape):
    fan_in, fan_out = shape[0], shape[-1]
    limit = float(np.sqrt(6.0 / (fan_in + fan_out)))
    return jax.random.uniform(key, shape, jnp.float32, -limit, limit)


class ImprovedGATPallas:
    """GATConv(in->hid, H heads, concat) -> ELU -> GATConv(hid*H->hid, 1 head)
       -> ELU -> GATConv(hid->out, 1 head) -> log_softmax(dim=1)."""

    def __init__(self, in_channels, hidden_channels, out_channels, heads=8,
                 key=jax.random.PRNGKey(0)):
        self.heads = heads
        self.hidden = hidden_channels
        self.out_channels = out_channels
        ks = jax.random.split(key, 9)
        # layer 1: heads=H, concat=True
        self.w1 = _glorot(ks[0], (in_channels, heads * hidden_channels))
        self.as1 = _glorot(ks[1], (heads, hidden_channels))
        self.ad1 = _glorot(ks[2], (heads, hidden_channels))
        self.b1 = jnp.zeros((heads * hidden_channels,), jnp.float32)
        # layer 2: heads=1, concat=False
        self.w2 = _glorot(ks[3], (heads * hidden_channels, hidden_channels))
        self.as2 = _glorot(ks[4], (1, hidden_channels))
        self.ad2 = _glorot(ks[5], (1, hidden_channels))
        self.b2 = jnp.zeros((hidden_channels,), jnp.float32)
        # layer 3: heads=1, concat=False
        self.w3 = _glorot(ks[6], (hidden_channels, out_channels))
        self.as3 = _glorot(ks[7], (1, out_channels))
        self.ad3 = _glorot(ks[8], (1, out_channels))
        self.b3 = jnp.zeros((out_channels,), jnp.float32)

    def __call__(self, x, adj, *, tile=None):
        N = x.shape[0]
        default_tile, vmem_limit = _tpu_defaults()
        tile = default_tile if tile is None else tile
        t = min(_round_up(N, 32), max(32, _round_up(tile, 32)))
        n_pad = _round_up(N, t)

        # Dense int8 adjacency mask adj[dst, src]; force self-loops
        # (GATConv default add_self_loops=True) and zero-pad to n_pad.
        adj_i8 = (adj != 0).astype(jnp.int8)
        adj_i8 = jnp.maximum(adj_i8, jnp.eye(N, dtype=jnp.int8))
        adj_p = jnp.zeros((n_pad, n_pad), jnp.int8).at[:N, :N].set(adj_i8)
        x_p = jnp.zeros((n_pad, x.shape[1]), x.dtype).at[:N].set(x)

        common = dict(tile_rows=t, vmem_limit_bytes=vmem_limit)
        h = gat_layer(x_p, self.w1, self.as1, self.ad1, adj_p, self.b1,
                      heads=self.heads, out_per_head=self.hidden, concat=True,
                      activation="elu", **common)
        h = gat_layer(h, self.w2, self.as2, self.ad2, adj_p, self.b2,
                      heads=1, out_per_head=self.hidden, concat=False,
                      activation="elu", **common)
        h = gat_layer(h, self.w3, self.as3, self.ad3, adj_p, self.b3,
                      heads=1, out_per_head=self.out_channels, concat=False,
                      activation="log_softmax", **common)
        return h[:N]


if __name__ == "__main__":
    N, in_ch, hid, out_ch, heads = 64, 8, 32, 4, 8

    key = jax.random.PRNGKey(0)
    kx, kp = jax.random.split(key)
    x = jax.random.normal(kx, (N, in_ch), jnp.float32)

    # Deterministic small graph: bidirectional ring + self-loops, adj[dst, src].
    src = np.arange(N)
    dst = (src + 1) % N
    adj = np.zeros((N, N), np.float32)
    adj[np.concatenate([dst, src]), np.concatenate([src, dst])] = 1.0
    adj[np.arange(N), np.arange(N)] = 1.0
    adj = jnp.asarray(adj)

    model = ImprovedGATPallas(in_ch, hid, out_ch, heads=heads, key=kp)
    # tile=32 -> 2 destination tiles per layer; grid (2, 8) / (2, 1) / (2, 1).
    fwd = jax.jit(functools.partial(model.__call__, tile=32))
    out = fwd(x, adj)
    jax.block_until_ready(out)

    assert out.shape == (N, out_ch)
    out_np = np.asarray(out)
    assert np.isfinite(out_np).all()
    # log_softmax rows should exponentiate-sum to ~1
    assert np.allclose(np.exp(out_np).sum(axis=1), 1.0, atol=1e-4)
    print("KERNEL_OK")
</pallas_src>

<mosaic_0001>
module attributes {stable_mosaic.version = 11 : i64} {
  func.func @_gat_layer_kernel(%arg0: i32, %arg1: i32, %arg2: memref<1x1x64xf32, #tpu.memory_space<vmem>>, %arg3: memref<1x32x1xf32, #tpu.memory_space<vmem>>, %arg4: memref<8x64x32xbf16, #tpu.memory_space<vmem>>, %arg5: memref<32x64xi8, #tpu.memory_space<vmem>>, %arg6: memref<1x1x32xf32, #tpu.memory_space<vmem>>, %arg7: memref<1x32x32xf32, #tpu.memory_space<vmem>>) attributes {dimension_semantics = [#tpu.dimension_semantics<parallel>, #tpu.dimension_semantics<arbitrary>], iteration_bounds = array<i64: 2, 8>, scalar_prefetch = 0 : i64, scratch_operands = 0 : i64, tpu.core_type = #tpu.core_type<tc>, window_params = [{transform_indices = @transform_0, window_bounds = array<i64: 1, 1, 64>}, {transform_indices = @transform_1, window_bounds = array<i64: 1, 32, 1>}, {pipeline_mode = #tpu.pipeline_mode<synchronous>, transform_indices = @transform_2, window_bounds = array<i64: 8, 64, 32>}, {transform_indices = @transform_3, window_bounds = array<i64: 32, 64>}, {transform_indices = @transform_4, window_bounds = array<i64: 1, 1, 32>}, {transform_indices = @transform_5, window_bounds = array<i64: 1, 32, 32>}]} {
    %c0 = arith.constant 0 : index
    %c0_0 = arith.constant 0 : index
    %c0_1 = arith.constant 0 : index
    %0 = vector.load %arg2[%c0, %c0_0, %c0_1] : memref<1x1x64xf32, #tpu.memory_space<vmem>>, vector<1x1x64xf32>
    %1 = vector.shape_cast %0 : vector<1x1x64xf32> to vector<1x64xf32>
    %c0_2 = arith.constant 0 : index
    %c0_3 = arith.constant 0 : index
    %c0_4 = arith.constant 0 : index
    %2 = vector.load %arg3[%c0_2, %c0_3, %c0_4] : memref<1x32x1xf32, #tpu.memory_space<vmem>>, vector<1x32x1xf32>
    %3 = vector.shape_cast %2 : vector<1x32x1xf32> to vector<32x1xf32>
    %c0_5 = arith.constant 0 : index
    %c0_6 = arith.constant 0 : index
    %4 = vector.load %arg5[%c0_5, %c0_6] : memref<32x64xi8, #tpu.memory_space<vmem>>, vector<32x64xi8>
    %c0_i8 = arith.constant 0 : i8
    %5 = vector.broadcast %c0_i8 : i8 to vector<32x64xi8>
    %6 = arith.cmpi ne, %4, %5 : vector<32x64xi8>
    %7 = vector.broadcast %3 : vector<32x1xf32> to vector<32x64xf32>
    %8 = vector.broadcast %1 : vector<1x64xf32> to vector<32x64xf32>
    %9 = arith.addf %7, %8 : vector<32x64xf32>
    %cst = arith.constant 2.000000e-01 : f32
    %10 = vector.broadcast %cst : f32 to vector<32x64xf32>
    %11 = arith.mulf %10, %9 : vector<32x64xf32>
    %12 = arith.maximumf %9, %11 : vector<32x64xf32>
    %cst_7 = arith.constant -1.000000e+30 : f32
    %13 = vector.broadcast %cst_7 : f32 to vector<32x64xf32>
    %14 = arith.select %6, %12, %13 : vector<32x64xi1>, vector<32x64xf32>
    %cst_8 = arith.constant dense<0xFF800000> : vector<32xf32>
    %15 = vector.multi_reduction <maximumf>, %14, %cst_8 [1] : vector<32x64xf32> to vector<32xf32>
    %16 = vector.shape_cast %15 : vector<32xf32> to vector<32x1xf32>
    %17 = vector.broadcast %16 : vector<32x1xf32> to vector<32x64xf32>
    %18 = arith.subf %14, %17 : vector<32x64xf32>
    %19 = math.exp %18 : vector<32x64xf32>
    %cst_9 = arith.constant dense<0.000000e+00> : vector<32xf32>
    %20 = vector.multi_reduction <add>, %19, %cst_9 [1] : vector<32x64xf32> to vector<32xf32>
    %21 = vector.shape_cast %20 : vector<32xf32> to vector<32x1xf32>
    %22 = arith.truncf %19 : vector<32x64xf32> to vector<32x64xbf16>
    %23 = arith.index_cast %arg1 : i32 to index
    %c0_10 = arith.constant 0 : index
    %c0_11 = arith.constant 0 : index
    %24 = vector.load %arg4[%23, %c0_10, %c0_11] : memref<8x64x32xbf16, #tpu.memory_space<vmem>>, vector<1x64x32xbf16>
    %25 = vector.shape_cast %24 : vector<1x64x32xbf16> to vector<64x32xbf16>
    %cst_12 = arith.constant dense<0.000000e+00> : vector<32x32xf32>
    %26 = tpu.matmul %22, %25, %cst_12 {dimension_numbers = #tpu.dot_dimension_numbers<[1], [0], [0], [1], [0, 0, 1, 1], [], []>} : vector<32x64xbf16>, vector<64x32xbf16>, vector<32x32xf32> -> vector<32x32xf32>
    %cst_13 = arith.constant 9.99999968E-21 : f32
    %27 = vector.broadcast %cst_13 : f32 to vector<32x1xf32>
    %28 = arith.maximumf %21, %27 : vector<32x1xf32>
    %29 = tpu.reciprocal %28 {approx = true} : vector<32x1xf32> -> vector<32x1xf32>
    %30 = vector.broadcast %29 : vector<32x1xf32> to vector<32x32xf32>
    %31 = arith.mulf %26, %30 : vector<32x32xf32>
    %c0_14 = arith.constant 0 : index
    %c0_15 = arith.constant 0 : index
    %c0_16 = arith.constant 0 : index
    %32 = vector.load %arg6[%c0_14, %c0_15, %c0_16] : memref<1x1x32xf32, #tpu.memory_space<vmem>>, vector<1x1x32xf32>
    %33 = vector.shape_cast %32 : vector<1x1x32xf32> to vector<1x32xf32>
    %34 = vector.broadcast %33 : vector<1x32xf32> to vector<32x32xf32>
    %35 = arith.addf %31, %34 : vector<32x32xf32>
    %cst_17 = arith.constant 0.000000e+00 : f32
    %36 = vector.broadcast %cst_17 : f32 to vector<32x32xf32>
    %37 = arith.cmpf ogt, %35, %36 : vector<32x32xf32>
    %cst_18 = arith.constant 0.000000e+00 : f32
    %38 = vector.broadcast %cst_18 : f32 to vector<32x32xf32>
    %39 = arith.minimumf %35, %38 : vector<32x32xf32>
    %40 = math.exp %39 : vector<32x32xf32>
    %cst_19 = arith.constant 1.000000e+00 : f32
    %41 = vector.broadcast %cst_19 : f32 to vector<32x32xf32>
    %42 = arith.subf %40, %41 : vector<32x32xf32>
    %43 = arith.select %37, %35, %42 : vector<32x32xi1>, vector<32x32xf32>
    %c0_20 = arith.constant 0 : index
    %c0_21 = arith.constant 0 : index
    %c0_22 = arith.constant 0 : index
    %44 = vector.load %arg7[%c0_20, %c0_21, %c0_22] : memref<1x32x32xf32, #tpu.memory_space<vmem>>, vector<1x32x32xf32>
    %45 = vector.shape_cast %44 : vector<1x32x32xf32> to vector<32x32xf32>
    %46 = vector.shape_cast %43 : vector<32x32xf32> to vector<1x32x32xf32>
    tpu.vector_store %arg7[%c0_20, %c0_21, %c0_22], %46 {strides = array<i32>} : memref<1x32x32xf32, #tpu.memory_space<vmem>>, vector<1x32x32xf32>,
    return
  }
  func.func @transform_0(%arg0: i32, %arg1: i32) -> (i32, i32, i32) {
    %c0_i32 = arith.constant 0 : i32
    %c0_i32_0 = arith.constant 0 : i32
    %c0_i32_1 = arith.constant 0 : i32
    return %arg1, %c0_i32, %c0_i32_0 : i32, i32, i32
  }
  func.func @transform_1(%arg0: i32, %arg1: i32) -> (i32, i32, i32) {
    %c0_i32 = arith.constant 0 : i32
    %c0_i32_0 = arith.constant 0 : i32
    return %arg1, %arg0, %c0_i32 : i32, i32, i32
  }
  func.func @transform_2(%arg0: i32, %arg1: i32) -> (i32, i32, i32) {
    %c0_i32 = arith.constant 0 : i32
    %c0_i32_0 = arith.constant 0 : i32
    %c0_i32_1 = arith.constant 0 : i32
    %c0_i32_2 = arith.constant 0 : i32
    return %c0_i32, %c0_i32_0, %c0_i32_1 : i32, i32, i32
  }
  func.func @transform_3(%arg0: i32, %arg1: i32) -> (i32, i32) {
    %c0_i32 = arith.constant 0 : i32
    %c0_i32_0 = arith.constant 0 : i32
    return %arg0, %c0_i32 : i32, i32
  }
  func.func @transform_4(%arg0: i32, %arg1: i32) -> (i32, i32, i32) {
    %c0_i32 = arith.constant 0 : i32
    %c0_i32_0 = arith.constant 0 : i32
    %c0_i32_1 = arith.constant 0 : i32
    return %arg1, %c0_i32, %c0_i32_0 : i32, i32, i32
  }
  func.func @transform_5(%arg0: i32, %arg1: i32) -> (i32, i32, i32) {
    %c0_i32 = arith.constant 0 : i32
    %c0_i32_0 = arith.constant 0 : i32
    return %arg1, %arg0, %c0_i32 : i32, i32, i32
  }
}

module attributes {stable_mosaic.version = 11 : i64} {
  func.func @_gat_layer_kernel(%arg0: i32, %arg1: i32, %arg2: memref<1x1x64xf32, #tpu.memory_space<vmem>>, %arg3: memref<1x32x1xf32, #tpu.memory_space<vmem>>, %arg4: memref<1x64x128xbf16, #tpu.memory_space<vmem>>, %arg5: memref<32x64xi8, #tpu.memory_space<vmem>>, %arg6: memref<1x1x128xf32, #tpu.memory_space<vmem>>, %arg7: memref<1x32x128xf32, #tpu.memory_space<vmem>>) attributes {dimension_semantics = [#tpu.dimension_semantics<parallel>, #tpu.dimension_semantics<arbitrary>], iteration_bounds = array<i64: 2, 1>, scalar_prefetch = 0 : i64, scratch_operands = 0 : i64, tpu.core_type = #tpu.core_type<tc>, window_params = [{transform_indices = @transform_0, window_bounds = array<i64: 1, 1, 64>}, {transform_indices = @transform_1, window_bounds = array<i64: 1, 32, 1>}, {pipeline_mode = #tpu.pipeline_mode<synchronous>, transform_indices = @transform_2, window_bounds = array<i64: 1, 64, 128>}, {transform_indices = @transform_3, window_bounds = array<i64: 32, 64>}, {pipeline_mode = #tpu.pipeline_mode<synchronous>, transform_indices = @transform_4, window_bounds = array<i64: 1, 1, 128>}, {transform_indices = @transform_5, window_bounds = array<i64: 1, 32, 128>}]} {
    %c0 = arith.constant 0 : index
    %c0_0 = arith.constant 0 : index
    %c0_1 = arith.constant 0 : index
    %0 = vector.load %arg2[%c0, %c0_0, %c0_1] : memref<1x1x64xf32, #tpu.memory_space<vmem>>, vector<1x1x64xf32>
    %1 = vector.shape_cast %0 : vector<1x1x64xf32> to vector<1x64xf32>
    %c0_2 = arith.constant 0 : index
    %c0_3 = arith.constant 0 : index
    %c0_4 = arith.constant 0 : index
    %2 = vector.load %arg3[%c0_2, %c0_3, %c0_4] : memref<1x32x1xf32, #tpu.memory_space<vmem>>, vector<1x32x1xf32>
    %3 = vector.shape_cast %2 : vector<1x32x1xf32> to vector<32x1xf32>
    %c0_5 = arith.constant 0 : index
    %c0_6 = arith.constant 0 : index
    %4 = vector.load %arg5[%c0_5, %c0_6] : memref<32x64xi8, #tpu.memory_space<vmem>>, vector<32x64xi8>
    %c0_i8 = arith.constant 0 : i8
    %5 = vector.broadcast %c0_i8 : i8 to vector<32x64xi8>
    %6 = arith.cmpi ne, %4, %5 : vector<32x64xi8>
    %7 = vector.broadcast %3 : vector<32x1xf32> to vector<32x64xf32>
    %8 = vector.broadcast %1 : vector<1x64xf32> to vector<32x64xf32>
    %9 = arith.addf %7, %8 : vector<32x64xf32>
    %cst = arith.constant 2.000000e-01 : f32
    %10 = vector.broadcast %cst : f32 to vector<32x64xf32>
    %11 = arith.mulf %10, %9 : vector<32x64xf32>
    %12 = arith.maximumf %9, %11 : vector<32x64xf32>
    %cst_7 = arith.constant -1.000000e+30 : f32
    %13 = vector.broadcast %cst_7 : f32 to vector<32x64xf32>
    %14 = arith.select %6, %12, %13 : vector<32x64xi1>, vector<32x64xf32>
    %cst_8 = arith.constant dense<0xFF800000> : vector<32xf32>
    %15 = vector.multi_reduction <maximumf>, %14, %cst_8 [1] : vector<32x64xf32> to vector<32xf32>
    %16 = vector.shape_cast %15 : vector<32xf32> to vector<32x1xf32>
    %17 = vector.broadcast %16 : vector<32x1xf32> to vector<32x64xf32>
    %18 = arith.subf %14, %17 : vector<32x64xf32>
    %19 = math.exp %18 : vector<32x64xf32>
    %cst_9 = arith.constant dense<0.000000e+00> : vector<32xf32>
    %20 = vector.multi_reduction <add>, %19, %cst_9 [1] : vector<32x64xf32> to vector<32xf32>
    %21 = vector.shape_cast %20 : vector<32xf32> to vector<32x1xf32>
    %22 = arith.truncf %19 : vector<32x64xf32> to vector<32x64xbf16>
    %23 = arith.index_cast %arg1 : i32 to index
    %c0_10 = arith.constant 0 : index
    %c0_11 = arith.constant 0 : index
    %24 = vector.load %arg4[%23, %c0_10, %c0_11] : memref<1x64x128xbf16, #tpu.memory_space<vmem>>, vector<1x64x128xbf16>
    %25 = vector.shape_cast %24 : vector<1x64x128xbf16> to vector<64x128xbf16>
    %cst_12 = arith.constant dense<0.000000e+00> : vector<32x128xf32>
    %26 = tpu.matmul %22, %25, %cst_12 {dimension_numbers = #tpu.dot_dimension_numbers<[1], [0], [0], [1], [0, 0, 1, 1], [], []>} : vector<32x64xbf16>, vector<64x128xbf16>, vector<32x128xf32> -> vector<32x128xf32>
    %cst_13 = arith.constant 9.99999968E-21 : f32
    %27 = vector.broadcast %cst_13 : f32 to vector<32x1xf32>
    %28 = arith.maximumf %21, %27 : vector<32x1xf32>
    %29 = tpu.reciprocal %28 {approx = true} : vector<32x1xf32> -> vector<32x1xf32>
    %30 = vector.broadcast %29 : vector<32x1xf32> to vector<32x128xf32>
    %31 = arith.mulf %26, %30 : vector<32x128xf32>
    %c0_i32 = arith.constant 0 : i32
    %32 = arith.cmpi eq, %arg1, %c0_i32 : i32
    %33 = arith.extui %32 : i1 to i32
    %c0_i32_14 = arith.constant 0 : i32
    %34 = arith.cmpi ne, %33, %c0_i32_14 : i32
    scf.if %34 {
      %c0_19 = arith.constant 0 : index
      %c0_20 = arith.constant 0 : index
      %c0_21 = arith.constant 0 : index
      %41 = vector.load %arg7[%c0_19, %c0_20, %c0_21] : memref<1x32x128xf32, #tpu.memory_space<vmem>>, vector<1x32x128xf32>
      %42 = vector.shape_cast %41 : vector<1x32x128xf32> to vector<32x128xf32>
      %43 = vector.shape_cast %31 : vector<32x128xf32> to vector<1x32x128xf32>
      tpu.vector_store %arg7[%c0_19, %c0_20, %c0_21], %43 {strides = array<i32>} : memref<1x32x128xf32, #tpu.memory_space<vmem>>, vector<1x32x128xf32>,
    } else {
    }
    %c0_i32_15 = arith.constant 0 : i32
    %35 = arith.cmpi sgt, %arg1, %c0_i32_15 : i32
    %36 = arith.extui %35 : i1 to i32
    %c0_i32_16 = arith.constant 0 : i32
    %37 = arith.cmpi ne, %36, %c0_i32_16 : i32
    scf.if %37 {
      %c0_19 = arith.constant 0 : index
      %c0_20 = arith.constant 0 : index
      %c0_21 = arith.constant 0 : index
      %41 = vector.load %arg7[%c0_19, %c0_20, %c0_21] : memref<1x32x128xf32, #tpu.memory_space<vmem>>, vector<1x32x128xf32>
      %42 = vector.shape_cast %41 : vector<1x32x128xf32> to vector<32x128xf32>
      %43 = arith.addf %42, %31 : vector<32x128xf32>
      %c0_22 = arith.constant 0 : index
      %c0_23 = arith.constant 0 : index
      %c0_24 = arith.constant 0 : index
      %44 = vector.load %arg7[%c0_22, %c0_23, %c0_24] : memref<1x32x128xf32, #tpu.memory_space<vmem>>, vector<1x32x128xf32>
      %45 = vector.shape_cast %44 : vector<1x32x128xf32> to vector<32x128xf32>
      %46 = vector.shape_cast %43 : vector<32x128xf32> to vector<1x32x128xf32>
      tpu.vector_store %arg7[%c0_22, %c0_23, %c0_24], %46 {strides = array<i32>} : memref<1x32x128xf32, #tpu.memory_space<vmem>>, vector<1x32x128xf32>,
    } else {
    }
    %c0_i32_17 = arith.constant 0 : i32
    %38 = arith.cmpi eq, %arg1, %c0_i32_17 : i32
    %39 = arith.extui %38 : i1 to i32
    %c0_i32_18 = arith.constant 0 : i32
    %40 = arith.cmpi ne, %39, %c0_i32_18 : i32
    scf.if %40 {
      %c0_19 = arith.constant 0 : index
      %c0_20 = arith.constant 0 : index
      %c0_21 = arith.constant 0 : index
      %41 = vector.load %arg7[%c0_19, %c0_20, %c0_21] : memref<1x32x128xf32, #tpu.memory_space<vmem>>, vector<1x32x128xf32>
      %42 = vector.shape_cast %41 : vector<1x32x128xf32> to vector<32x128xf32>
      %cst_22 = arith.constant 1.000000e+00 : f32
      %43 = vector.broadcast %cst_22 : f32 to vector<32x128xf32>
      %44 = arith.mulf %42, %43 : vector<32x128xf32>
      %c0_23 = arith.constant 0 : index
      %c0_24 = arith.constant 0 : index
      %c0_25 = arith.constant 0 : index
      %45 = vector.load %arg6[%c0_23, %c0_24, %c0_25] : memref<1x1x128xf32, #tpu.memory_space<vmem>>, vector<1x1x128xf32>
      %46 = vector.shape_cast %45 : vector<1x1x128xf32> to vector<1x128xf32>
      %47 = vector.broadcast %46 : vector<1x128xf32> to vector<32x128xf32>
      %48 = arith.addf %44, %47 : vector<32x128xf32>
      %cst_26 = arith.constant 0.000000e+00 : f32
      %49 = vector.broadcast %cst_26 : f32 to vector<32x128xf32>
      %50 = arith.cmpf ogt, %48, %49 : vector<32x128xf32>
      %cst_27 = arith.constant 0.000000e+00 : f32
      %51 = vector.broadcast %cst_27 : f32 to vector<32x128xf32>
      %52 = arith.minimumf %48, %51 : vector<32x128xf32>
      %53 = math.exp %52 : vector<32x128xf32>
      %cst_28 = arith.constant 1.000000e+00 : f32
      %54 = vector.broadcast %cst_28 : f32 to vector<32x128xf32>
      %55 = arith.subf %53, %54 : vector<32x128xf32>
      %56 = arith.select %50, %48, %55 : vector<32x128xi1>, vector<32x128xf32>
      %c0_29 = arith.constant 0 : index
      %c0_30 = arith.constant 0 : index
      %c0_31 = arith.constant 0 : index
      %57 = vector.load %arg7[%c0_29, %c0_30, %c0_31] : memref<1x32x128xf32, #tpu.memory_space<vmem>>, vector<1x32x128xf32>
      %58 = vector.shape_cast %57 : vector<1x32x128xf32> to vector<32x128xf32>
      %59 = vector.shape_cast %56 : vector<32x128xf32> to vector<1x32x128xf32>
      tpu.vector_store %arg7[%c0_29, %c0_30, %c0_31], %59 {strides = array<i32>} : memref<1x32x128xf32, #tpu.memory_space<vmem>>, vector<1x32x128xf32>,
    } else {
    }
    return
  }
  func.func @transform_0(%arg0: i32, %arg1: i32) -> (i32, i32, i32) {
    %c0_i32 = arith.constant 0 : i32
    %c0_i32_0 = arith.constant 0 : i32
    %c0_i32_1 = arith.constant 0 : i32
    return %arg1, %c0_i32, %c0_i32_0 : i32, i32, i32
  }
  func.func @transform_1(%arg0: i32, %arg1: i32) -> (i32, i32, i32) {
    %c0_i32 = arith.constant 0 : i32
    %c0_i32_0 = arith.constant 0 : i32
    return %arg1, %arg0, %c0_i32 : i32, i32, i32
  }
  func.func @transform_2(%arg0: i32, %arg1: i32) -> (i32, i32, i32) {
    %c0_i32 = arith.constant 0 : i32
    %c0_i32_0 = arith.constant 0 : i32
    %c0_i32_1 = arith.constant 0 : i32
    %c0_i32_2 = arith.constant 0 : i32
    return %c0_i32, %c0_i32_0, %c0_i32_1 : i32, i32, i32
  }
  func.func @transform_3(%arg0: i32, %arg1: i32) -> (i32, i32) {
    %c0_i32 = arith.constant 0 : i32
    %c0_i32_0 = arith.constant 0 : i32
    return %arg0, %c0_i32 : i32, i32
  }
  func.func @transform_4(%arg0: i32, %arg1: i32) -> (i32, i32, i32) {
    %c0_i32 = arith.constant 0 : i32
    %c0_i32_0 = arith.constant 0 : i32
    %c0_i32_1 = arith.constant 0 : i32
    %c0_i32_2 = arith.constant 0 : i32
    return %c0_i32, %c0_i32_0, %c0_i32_1 : i32, i32, i32
  }
  func.func @transform_5(%arg0: i32, %arg1: i32) -> (i32, i32, i32) {
    %c0_i32 = arith.constant 0 : i32
    %c0_i32_0 = arith.constant 0 : i32
    %c0_i32_1 = arith.constant 0 : i32
    return %c0_i32, %arg0, %c0_i32_0 : i32, i32, i32
  }
}

module attributes {stable_mosaic.version = 11 : i64} {
  func.func @_gat_layer_kernel(%arg0: i32, %arg1: i32, %arg2: memref<1x1x64xf32, #tpu.memory_space<vmem>>, %arg3: memref<1x32x1xf32, #tpu.memory_space<vmem>>, %arg4: memref<1x64x128xbf16, #tpu.memory_space<vmem>>, %arg5: memref<32x64xi8, #tpu.memory_space<vmem>>, %arg6: memref<1x1x128xf32, #tpu.memory_space<vmem>>, %arg7: memref<1x32x128xf32, #tpu.memory_space<vmem>>) attributes {dimension_semantics = [#tpu.dimension_semantics<parallel>, #tpu.dimension_semantics<arbitrary>], iteration_bounds = array<i64: 2, 1>, scalar_prefetch = 0 : i64, scratch_operands = 0 : i64, tpu.core_type = #tpu.core_type<tc>, window_params = [{transform_indices = @transform_0, window_bounds = array<i64: 1, 1, 64>}, {transform_indices = @transform_1, window_bounds = array<i64: 1, 32, 1>}, {pipeline_mode = #tpu.pipeline_mode<synchronous>, transform_indices = @transform_2, window_bounds = array<i64: 1, 64, 128>}, {transform_indices = @transform_3, window_bounds = array<i64: 32, 64>}, {pipeline_mode = #tpu.pipeline_mode<synchronous>, transform_indices = @transform_4, window_bounds = array<i64: 1, 1, 128>}, {transform_indices = @transform_5, window_bounds = array<i64: 1, 32, 128>}]} {
    %c0 = arith.constant 0 : index
    %c0_0 = arith.constant 0 : index
    %c0_1 = arith.constant 0 : index
    %0 = vector.load %arg2[%c0, %c0_0, %c0_1] : memref<1x1x64xf32, #tpu.memory_space<vmem>>, vector<1x1x64xf32>
    %1 = vector.shape_cast %0 : vector<1x1x64xf32> to vector<1x64xf32>
    %c0_2 = arith.constant 0 : index
    %c0_3 = arith.constant 0 : index
    %c0_4 = arith.constant 0 : index
    %2 = vector.load %arg3[%c0_2, %c0_3, %c0_4] : memref<1x32x1xf32, #tpu.memory_space<vmem>>, vector<1x32x1xf32>
    %3 = vector.shape_cast %2 : vector<1x32x1xf32> to vector<32x1xf32>
    %c0_5 = arith.constant 0 : index
    %c0_6 = arith.constant 0 : index
    %4 = vector.load %arg5[%c0_5, %c0_6] : memref<32x64xi8, #tpu.memory_space<vmem>>, vector<32x64xi8>
    %c0_i8 = arith.constant 0 : i8
    %5 = vector.broadcast %c0_i8 : i8 to vector<32x64xi8>
    %6 = arith.cmpi ne, %4, %5 : vector<32x64xi8>
    %7 = vector.broadcast %3 : vector<32x1xf32> to vector<32x64xf32>
    %8 = vector.broadcast %1 : vector<1x64xf32> to vector<32x64xf32>
    %9 = arith.addf %7, %8 : vector<32x64xf32>
    %cst = arith.constant 2.000000e-01 : f32
    %10 = vector.broadcast %cst : f32 to vector<32x64xf32>
    %11 = arith.mulf %10, %9 : vector<32x64xf32>
    %12 = arith.maximumf %9, %11 : vector<32x64xf32>
    %cst_7 = arith.constant -1.000000e+30 : f32
    %13 = vector.broadcast %cst_7 : f32 to vector<32x64xf32>
    %14 = arith.select %6, %12, %13 : vector<32x64xi1>, vector<32x64xf32>
    %cst_8 = arith.constant dense<0xFF800000> : vector<32xf32>
    %15 = vector.multi_reduction <maximumf>, %14, %cst_8 [1] : vector<32x64xf32> to vector<32xf32>
    %16 = vector.shape_cast %15 : vector<32xf32> to vector<32x1xf32>
    %17 = vector.broadcast %16 : vector<32x1xf32> to vector<32x64xf32>
    %18 = arith.subf %14, %17 : vector<32x64xf32>
    %19 = math.exp %18 : vector<32x64xf32>
    %cst_9 = arith.constant dense<0.000000e+00> : vector<32xf32>
    %20 = vector.multi_reduction <add>, %19, %cst_9 [1] : vector<32x64xf32> to vector<32xf32>
    %21 = vector.shape_cast %20 : vector<32xf32> to vector<32x1xf32>
    %22 = arith.truncf %19 : vector<32x64xf32> to vector<32x64xbf16>
    %23 = arith.index_cast %arg1 : i32 to index
    %c0_10 = arith.constant 0 : index
    %c0_11 = arith.constant 0 : index
    %24 = vector.load %arg4[%23, %c0_10, %c0_11] : memref<1x64x128xbf16, #tpu.memory_space<vmem>>, vector<1x64x128xbf16>
    %25 = vector.shape_cast %24 : vector<1x64x128xbf16> to vector<64x128xbf16>
    %cst_12 = arith.constant dense<0.000000e+00> : vector<32x128xf32>
    %26 = tpu.matmul %22, %25, %cst_12 {dimension_numbers = #tpu.dot_dimension_numbers<[1], [0], [0], [1], [0, 0, 1, 1], [], []>} : vector<32x64xbf16>, vector<64x128xbf16>, vector<32x128xf32> -> vector<32x128xf32>
    %cst_13 = arith.constant 9.99999968E-21 : f32
    %27 = vector.broadcast %cst_13 : f32 to vector<32x1xf32>
    %28 = arith.maximumf %21, %27 : vector<32x1xf32>
    %29 = tpu.reciprocal %28 {approx = true} : vector<32x1xf32> -> vector<32x1xf32>
    %30 = vector.broadcast %29 : vector<32x1xf32> to vector<32x128xf32>
    %31 = arith.mulf %26, %30 : vector<32x128xf32>
    %c0_i32 = arith.constant 0 : i32
    %32 = arith.cmpi eq, %arg1, %c0_i32 : i32
    %33 = arith.extui %32 : i1 to i32
    %c0_i32_14 = arith.constant 0 : i32
    %34 = arith.cmpi ne, %33, %c0_i32_14 : i32
    scf.if %34 {
      %c0_19 = arith.constant 0 : index
      %c0_20 = arith.constant 0 : index
      %c0_21 = arith.constant 0 : index
      %41 = vector.load %arg7[%c0_19, %c0_20, %c0_21] : memref<1x32x128xf32, #tpu.memory_space<vmem>>, vector<1x32x128xf32>
      %42 = vector.shape_cast %41 : vector<1x32x128xf32> to vector<32x128xf32>
      %43 = vector.shape_cast %31 : vector<32x128xf32> to vector<1x32x128xf32>
      tpu.vector_store %arg7[%c0_19, %c0_20, %c0_21], %43 {strides = array<i32>} : memref<1x32x128xf32, #tpu.memory_space<vmem>>, vector<1x32x128xf32>,
    } else {
    }
    %c0_i32_15 = arith.constant 0 : i32
    %35 = arith.cmpi sgt, %arg1, %c0_i32_15 : i32
    %36 = arith.extui %35 : i1 to i32
    %c0_i32_16 = arith.constant 0 : i32
    %37 = arith.cmpi ne, %36, %c0_i32_16 : i32
    scf.if %37 {
      %c0_19 = arith.constant 0 : index
      %c0_20 = arith.constant 0 : index
      %c0_21 = arith.constant 0 : index
      %41 = vector.load %arg7[%c0_19, %c0_20, %c0_21] : memref<1x32x128xf32, #tpu.memory_space<vmem>>, vector<1x32x128xf32>
      %42 = vector.shape_cast %41 : vector<1x32x128xf32> to vector<32x128xf32>
      %43 = arith.addf %42, %31 : vector<32x128xf32>
      %c0_22 = arith.constant 0 : index
      %c0_23 = arith.constant 0 : index
      %c0_24 = arith.constant 0 : index
      %44 = vector.load %arg7[%c0_22, %c0_23, %c0_24] : memref<1x32x128xf32, #tpu.memory_space<vmem>>, vector<1x32x128xf32>
      %45 = vector.shape_cast %44 : vector<1x32x128xf32> to vector<32x128xf32>
      %46 = vector.shape_cast %43 : vector<32x128xf32> to vector<1x32x128xf32>
      tpu.vector_store %arg7[%c0_22, %c0_23, %c0_24], %46 {strides = array<i32>} : memref<1x32x128xf32, #tpu.memory_space<vmem>>, vector<1x32x128xf32>,
    } else {
    }
    %c0_i32_17 = arith.constant 0 : i32
    %38 = arith.cmpi eq, %arg1, %c0_i32_17 : i32
    %39 = arith.extui %38 : i1 to i32
    %c0_i32_18 = arith.constant 0 : i32
    %40 = arith.cmpi ne, %39, %c0_i32_18 : i32
    scf.if %40 {
      %c0_19 = arith.constant 0 : index
      %c0_20 = arith.constant 0 : index
      %c0_21 = arith.constant 0 : index
      %41 = vector.load %arg7[%c0_19, %c0_20, %c0_21] : memref<1x32x128xf32, #tpu.memory_space<vmem>>, vector<1x32x128xf32>
      %42 = vector.shape_cast %41 : vector<1x32x128xf32> to vector<32x128xf32>
      %cst_22 = arith.constant 1.000000e+00 : f32
      %43 = vector.broadcast %cst_22 : f32 to vector<32x128xf32>
      %44 = arith.mulf %42, %43 : vector<32x128xf32>
      %c0_23 = arith.constant 0 : index
      %c0_24 = arith.constant 0 : index
      %c0_25 = arith.constant 0 : index
      %45 = vector.load %arg6[%c0_23, %c0_24, %c0_25] : memref<1x1x128xf32, #tpu.memory_space<vmem>>, vector<1x1x128xf32>
      %46 = vector.shape_cast %45 : vector<1x1x128xf32> to vector<1x128xf32>
      %47 = vector.broadcast %46 : vector<1x128xf32> to vector<32x128xf32>
      %48 = arith.addf %44, %47 : vector<32x128xf32>
      %49 = tpu.iota {dimensions = array<i32: 1>} : vector<32x128xi32>
      %c4_i32 = arith.constant 4 : i32
      %50 = vector.broadcast %c4_i32 : i32 to vector<32x128xi32>
      %51 = arith.cmpi slt, %49, %50 : vector<32x128xi32>
      %cst_26 = arith.constant -1.000000e+30 : f32
      %52 = vector.broadcast %cst_26 : f32 to vector<32x128xf32>
      %53 = arith.select %51, %48, %52 : vector<32x128xi1>, vector<32x128xf32>
      %cst_27 = arith.constant dense<0xFF800000> : vector<32xf32>
      %54 = vector.multi_reduction <maximumf>, %53, %cst_27 [1] : vector<32x128xf32> to vector<32xf32>
      %55 = vector.shape_cast %54 : vector<32xf32> to vector<32x1xf32>
      %56 = vector.broadcast %55 : vector<32x1xf32> to vector<32x128xf32>
      %57 = arith.subf %53, %56 : vector<32x128xf32>
      %58 = math.exp %57 : vector<32x128xf32>
      %cst_28 = arith.constant dense<0.000000e+00> : vector<32xf32>
      %59 = vector.multi_reduction <add>, %58, %cst_28 [1] : vector<32x128xf32> to vector<32xf32>
      %60 = vector.shape_cast %59 : vector<32xf32> to vector<32x1xf32>
      %61 = math.log %60 : vector<32x1xf32>
      %62 = vector.broadcast %61 : vector<32x1xf32> to vector<32x128xf32>
      %63 = arith.subf %57, %62 : vector<32x128xf32>
      %c0_29 = arith.constant 0 : index
      %c0_30 = arith.constant 0 : index
      %c0_31 = arith.constant 0 : index
      %64 = vector.load %arg7[%c0_29, %c0_30, %c0_31] : memref<1x32x128xf32, #tpu.memory_space<vmem>>, vector<1x32x128xf32>
      %65 = vector.shape_cast %64 : vector<1x32x128xf32> to vector<32x128xf32>
      %66 = vector.shape_cast %63 : vector<32x128xf32> to vector<1x32x128xf32>
      tpu.vector_store %arg7[%c0_29, %c0_30, %c0_31], %66 {strides = array<i32>} : memref<1x32x128xf32, #tpu.memory_space<vmem>>, vector<1x32x128xf32>,
    } else {
    }
    return
  }
  func.func @transform_0(%arg0: i32, %arg1: i32) -> (i32, i32, i32) {
    %c0_i32 = arith.constant 0 : i32
    %c0_i32_0 = arith.constant 0 : i32
    %c0_i32_1 = arith.constant 0 : i32
    return %arg1, %c0_i32, %c0_i32_0 : i32, i32, i32
  }
  func.func @transform_1(%arg0: i32, %arg1: i32) -> (i32, i32, i32) {
    %c0_i32 = arith.constant 0 : i32
    %c0_i32_0 = arith.constant 0 : i32
    return %arg1, %arg0, %c0_i32 : i32, i32, i32
  }
  func.func @transform_2(%arg0: i32, %arg1: i32) -> (i32, i32, i32) {
    %c0_i32 = arith.constant 0 : i32
    %c0_i32_0 = arith.constant 0 : i32
    %c0_i32_1 = arith.constant 0 : i32
    %c0_i32_2 = arith.constant 0 : i32
    return %c0_i32, %c0_i32_0, %c0_i32_1 : i32, i32, i32
  }
  func.func @transform_3(%arg0: i32, %arg1: i32) -> (i32, i32) {
    %c0_i32 = arith.constant 0 : i32
    %c0_i32_0 = arith.constant 0 : i32
    return %arg0, %c0_i32 : i32, i32
  }
  func.func @transform_4(%arg0: i32, %arg1: i32) -> (i32, i32, i32) {
    %c0_i32 = arith.constant 0 : i32
    %c0_i32_0 = arith.constant 0 : i32
    %c0_i32_1 = arith.constant 0 : i32
    %c0_i32_2 = arith.constant 0 : i32
    return %c0_i32, %c0_i32_0, %c0_i32_1 : i32, i32, i32
  }
  func.func @transform_5(%arg0: i32, %arg1: i32) -> (i32, i32, i32) {
    %c0_i32 = arith.constant 0 : i32
    %c0_i32_0 = arith.constant 0 : i32
    %c0_i32_1 = arith.constant 0 : i32
    return %c0_i32, %arg0, %c0_i32_0 : i32, i32, i32
  }
}

</mosaic_0001>

<llo_original>
// kernel: a_call__.3
$region0: #{a_call__.3}
  #allocation0 [shape = 'u32[]', space=smem, size = 0x4, offset = 0x4, fixed_abs, tag = 'smem constant byte address 0x4 - core index']
  #allocation1 [shape = 'u32[144,128]{1,0:T(1,128)}', space=vmem, size = 0x12000, scoped, tag = 'internal scratch']
  %s0 = inlined_call_operand.vmem [shape: f32[8,1,64], index: 0, kind: input, shape index: {}]
  %s1 = inlined_call_operand.vmem [shape: f32[8,64,1], index: 1, kind: input, shape index: {}]
  %s2 = inlined_call_operand.vmem [shape: bf16[8,64,32], index: 2, kind: input, shape index: {}]
  %s3 = inlined_call_operand.vmem [shape: s8[64,64], index: 3, kind: input, shape index: {}]
  %s4 = inlined_call_operand.vmem [shape: f32[8,1,32], index: 4, kind: input, shape index: {}]
  %s5 = inlined_call_operand.vmem [shape: f32[8,64,32], index: 5, kind: output, shape index: {}]
  %s6 = sld [smem:[#allocation0]]
  $region53: #{a_call__.3} parent=0
    _
  %s8 = ssub.s32 1, %s6
  %s9 = scalar_select 0, %s8, %s6
  loop: start=0, step=1, limit=18
  $region2: #{a_call__.3} parent=0 // loop_pre_header
    _
  $region3: #{a_call__.3} parent=0 // loop_header
    %s11 = sphi 0, %s15
    %p12 = scmp.ge.s32.totalorder %s11, 18
    %s18 = sphi 0, %s30
    %s19 = sphi 0, %s26
    %s20 = sphi 0, %s18
    %s21 = sphi 0, %s19
    %s22 = sphi 0, %s20
    %s23 = sphi 0, %s21
    %s33 = sphi 0, %s35
    %s36 = sphi 0, %s33
    %s37 = sphi 0, %s36
    %s53 = sphi 0, %s37
    %s61 = sphi 0, %s63
    %s64 = sphi 0, %s61
    %s65 = sphi 0, %s64
    %s81 = sphi 0, %s65
    %s85 = sphi 0, %s85
    %s87 = sphi 0, %s85
    %s88 = sphi 0, %s87
    %s102 = sphi 0, %s88
    %s108 = sphi 0, %s110
    %s111 = sphi 0, %s108
    %s112 = sphi 0, %s111
    %s128 = sphi 0, %s112
    %s134 = sphi 0, %s136
    %s137 = sphi 0, %s134
    %s138 = sphi 0, %s137
    %s154 = sphi 0, %s138
    %s162 = sphi 0, %s164
    %s165 = sphi 0, %s162
    %s166 = sphi 0, %s165
    %s182 = sphi 0, %s166
  $region4: #{a_call__.3} parent=0 // loop_header_branch
    %14 = sbr.rel (%p12) target = $region8
  $region5: #{a_call__.3} parent=0 // loop_body
    %s16 = ssub.s32 %s11, 1
    %s17 = ssub.s32 %s11, 2
    %s24 = sadd.s32 1, %s19
    %p25 = scmp.ge.s32.totalorder %s24, 8
    %s26 = scalar_select %p25, 0, %s24
    %s27 = sadd.s32 1, %s18
    %s28 = scalar_select %p25, %s27, %s18
    %p29 = scmp.ge.s32.totalorder %s28, 2
    %s30 = scalar_select %p29, 0, %s28
    %s31 = ssub.s32 %s19, %s26
    %p32 = scmp.eq.s32.totalorder %s31, 0
    %s34 = sadd.s32 %s33, 1
    %s35 = scalar_select %p32, %s33, %s34
    %p38 = pneg %p32
    %p39 = scmp.eq.s32.totalorder %s11, 15
    %p40 = por %p38, %p39
    %p41 = scmp.ne.s32.totalorder %s33, %s36
    %p42 = scmp.eq.s32.totalorder %s11, 0
    %p43 = por %p41, %p42
    %p44 = scmp.ne.s32.totalorder %s33, %s36
    %p45 = scmp.eq.s32.totalorder %s16, 15
    %p46 = por %p44, %p45
    %p47 = scmp.ne.s32.totalorder %s36, %s37
    %p48 = scmp.eq.s32.totalorder %s16, 0
    %p49 = por %p47, %p48
    %p50 = scmp.ne.s32.totalorder %s36, %s37
    %p51 = scmp.eq.s32.totalorder %s17, 15
    %p52 = por %p50, %p51
    %p54 = scmp.ne.s32.totalorder %s37, %s53
    %p55 = scmp.eq.s32.totalorder %s17, 0
    %p56 = por %p54, %p55
    %s57 = ssub.s32 %s19, %s26
    %s58 = ssub.s32 %s18, %s30
    %s59 = sor.u32 %s57, %s58
    %p60 = scmp.eq.s32.totalorder %s59, 0
    %s62 = sadd.s32 %s61, 1
    %s63 = scalar_select %p60, %s61, %s62
    %p66 = pneg %p60
    %p67 = scmp.eq.s32.totalorder %s11, 15
    %p68 = por %p66, %p67
    %p69 = scmp.ne.s32.totalorder %s61, %s64
    %p70 = scmp.eq.s32.totalorder %s11, 0
    %p71 = por %p69, %p70
    %p72 = scmp.ne.s32.totalorder %s61, %s64
    %p73 = scmp.eq.s32.totalorder %s16, 15
    %p74 = por %p72, %p73
    %p75 = scmp.ne.s32.totalorder %s64, %s65
    %p76 = scmp.eq.s32.totalorder %s16, 0
    %p77 = por %p75, %p76
    %p78 = scmp.ne.s32.totalorder %s64, %s65
    %p79 = scmp.eq.s32.totalorder %s17, 15
    %p80 = por %p78, %p79
    %p82 = scmp.ne.s32.totalorder %s65, %s81
    %p83 = scmp.eq.s32.totalorder %s17, 0
    %p84 = por %p82, %p83
    %s86 = sadd.s32 %s85, 1
    %p89 = scmp.eq.s32.totalorder %s11, 15
    %p90 = scmp.ne.s32.totalorder %s85, %s87
    %p91 = scmp.eq.s32.totalorder %s11, 0
    %p92 = por %p90, %p91
    %p93 = scmp.ne.s32.totalorder %s85, %s87
    %p94 = scmp.eq.s32.totalorder %s16, 15
    %p95 = por %p93, %p94
    %p96 = scmp.ne.s32.totalorder %s87, %s88
    %p97 = scmp.eq.s32.totalorder %s16, 0
    %p98 = por %p96, %p97
    %p99 = scmp.ne.s32.totalorder %s87, %s88
    %p100 = scmp.eq.s32.totalorder %s17, 15
    %p101 = por %p99, %p100
    %p103 = scmp.ne.s32.totalorder %s88, %s102
    %p104 = scmp.eq.s32.totalorder %s17, 0
    %p105 = por %p103, %p104
    %s106 = ssub.s32 %s18, %s30
    %p107 = scmp.eq.s32.totalorder %s106, 0
    %s109 = sadd.s32 %s108, 1
    %s110 = scalar_select %p107, %s108, %s109
    %p113 = pneg %p107
    %p114 = scmp.eq.s32.totalorder %s11, 15
    %p115 = por %p113, %p114
    %p116 = scmp.ne.s32.totalorder %s108, %s111
    %p117 = scmp.eq.s32.totalorder %s11, 0
    %p118 = por %p116, %p117
    %p119 = scmp.ne.s32.totalorder %s108, %s111
    %p120 = scmp.eq.s32.totalorder %s16, 15
    %p121 = por %p119, %p120
    %p122 = scmp.ne.s32.totalorder %s111, %s112
    %p123 = scmp.eq.s32.totalorder %s16, 0
    %p124 = por %p122, %p123
    %p125 = scmp.ne.s32.totalorder %s111, %s112
    %p126 = scmp.eq.s32.totalorder %s17, 15
    %p127 = por %p125, %p126
    %p129 = scmp.ne.s32.totalorder %s112, %s128
    %p130 = scmp.eq.s32.totalorder %s17, 0
    %p131 = por %p129, %p130
    %s132 = ssub.s32 %s19, %s26
    %p133 = scmp.eq.s32.totalorder %s132, 0
    %s135 = sadd.s32 %s134, 1
    %s136 = scalar_select %p133, %s134, %s135
    %p139 = pneg %p133
    %p140 = scmp.eq.s32.totalorder %s11, 15
    %p141 = por %p139, %p140
    %p142 = scmp.ne.s32.totalorder %s134, %s137
    %p143 = scmp.eq.s32.totalorder %s11, 0
    %p144 = por %p142, %p143
    %p145 = scmp.ne.s32.totalorder %s134, %s137
    %p146 = scmp.eq.s32.totalorder %s16, 15
    %p147 = por %p145, %p146
    %p148 = scmp.ne.s32.totalorder %s137, %s138
    %p149 = scmp.eq.s32.totalorder %s16, 0
    %p150 = por %p148, %p149
    %p151 = scmp.ne.s32.totalorder %s137, %s138
    %p152 = scmp.eq.s32.totalorder %s17, 15
    %p153 = por %p151, %p152
    %p155 = scmp.ne.s32.totalorder %s138, %s154
    %p156 = scmp.eq.s32.totalorder %s17, 0
    %p157 = por %p155, %p156
    %s158 = ssub.s32 %s19, %s26
    %s159 = ssub.s32 %s18, %s30
    %s160 = sor.u32 %s158, %s159
    %p161 = scmp.eq.s32.totalorder %s160, 0
    %s163 = sadd.s32 %s162, 1
    %s164 = scalar_select %p161, %s162, %s163
    %p167 = pneg %p161
    %p168 = scmp.eq.s32.totalorder %s11, 15
    %p169 = por %p167, %p168
    %p170 = scmp.ne.s32.totalorder %s162, %s165
    %p171 = scmp.eq.s32.totalorder %s11, 0
    %p172 = por %p170, %p171
    %p173 = scmp.ne.s32.totalorder %s162, %s165
    %p174 = scmp.eq.s32.totalorder %s16, 15
    %p175 = por %p173, %p174
    %p176 = scmp.ne.s32.totalorder %s165, %s166
    %p177 = scmp.eq.s32.totalorder %s16, 0
    %p178 = por %p176, %p177
    %p179 = scmp.ne.s32.totalorder %s165, %s166
    %p180 = scmp.eq.s32.totalorder %s17, 15
    %p181 = por %p179, %p180
    %p183 = scmp.ne.s32.totalorder %s166, %s182
    %p184 = scmp.eq.s32.totalorder %s17, 0
    %p185 = por %p183, %p184
    %p186 = scmp.le.s32.totalorder 1, %s11
    %p187 = scmp.lt.s32.totalorder %s11, 17
    %p188 = pnand %p186, %p187
    %p189 = pneg %p188
    // Predicated region
    $region9: #{a_call__.3} parent=5 // pred_check
      _
    $region10: #{a_call__.3} parent=5 // pred_check_branch
      %191 = sbr.rel (%p188) target = $region12
    $region11: #{a_call__.3} parent=5 // pred_region
      %s192 = ssub.s32 %s11, 1
      // Predicated region
      $region13: #{a_call__.3} parent=11 // pred_check
        %p193 = pneg %p98
      $region14: #{a_call__.3} parent=11 // pred_check_branch
        %195 = sbr.rel (%p193) target = $region16
      $region15: #{a_call__.3} parent=11 // pred_region
        _
      $region16: #{a_call__.3} parent=11 // pred_fallthru
        _
    $region12: #{a_call__.3} parent=5 // pred_fallthru
      _
    %p196 = scmp.lt.s32.totalorder %s11, 16
    // Predicated region
    $region17: #{a_call__.3} parent=5 // pred_check
      %p197 = pneg %p196
    $region18: #{a_call__.3} parent=5 // pred_check_branch
      %199 = sbr.rel (%p197) target = $region20
    $region19: #{a_call__.3} parent=5 // pred_region
      // Predicated region
      $region21: #{a_call__.3} parent=19 // pred_check
        %p200 = pneg %p43
      $region22: #{a_call__.3} parent=19 // pred_check_branch
        %202 = sbr.rel (%p200) target = $region24
      $region23: #{a_call__.3} parent=19 // pred_region
        %p203 = scmp.lt.s32.totalorder %s19, 7
        %s204 = scalar_select %p203, %s19, 7
        %s205 = scalar_lea.vmem %s0, %s204
      $region24: #{a_call__.3} parent=19 // pred_fallthru
        _
      // Predicated region
      $region25: #{a_call__.3} parent=19 // pred_check
        %p206 = pneg %p71
      $region26: #{a_call__.3} parent=19 // pred_check_branch
        %208 = sbr.rel (%p206) target = $region28
      $region27: #{a_call__.3} parent=19 // pred_region
        %s209 = smul.u32 4, %s18
        %p210 = scmp.lt.s32.totalorder %s19, 7
        %s211 = scalar_select %p210, %s19, 7
        %p212 = scmp.lt.s32.totalorder %s209, 7
        %s213 = scalar_select %p212, %s209, 7
        %s214 = smul.addr %s211, 8
        %s215 = sadd.s32 %s213, %s214
        %s216 = smul.addr %s215, 8
        %s217 = scalar_lea.vmem %s1, %s216
        %s218 = smul.u32 4, %s18
      $region28: #{a_call__.3} parent=19 // pred_fallthru
        _
      // Predicated region
      $region29: #{a_call__.3} parent=19 // pred_check
        %p219 = pneg %p118
      $region30: #{a_call__.3} parent=19 // pred_check_branch
        %221 = sbr.rel (%p219) target = $region32
      $region31: #{a_call__.3} parent=19 // pred_region
        %p222 = scmp.lt.s32.totalorder %s18, 1
        %s223 = scalar_select %p222, %s18, 1
        %s224 = smul.addr %s223, 8
        %s225 = scalar_lea.vmem %s3, %s224
      $region32: #{a_call__.3} parent=19 // pred_fallthru
        _
      // Predicated region
      $region33: #{a_call__.3} parent=19 // pred_check
        %p226 = pneg %p144
      $region34: #{a_call__.3} parent=19 // pred_check_branch
        %228 = sbr.rel (%p226) target = $region36
      $region35: #{a_call__.3} parent=19 // pred_region
        %p229 = scmp.lt.s32.totalorder %s19, 7
        %s230 = scalar_select %p229, %s19, 7
        %s231 = scalar_lea.vmem %s4, %s230
      $region36: #{a_call__.3} parent=19 // pred_fallthru
        _
    $region20: #{a_call__.3} parent=5 // pred_fallthru
      _
    %p232 = scmp.le.s32.totalorder 1, %s11
    %p233 = scmp.lt.s32.totalorder %s11, 17
    %p234 = pnand %p232, %p233
    %p235 = pneg %p234
    // Predicated region
    $region37: #{a_call__.3} parent=5 // pred_check
      _
    $region38: #{a_call__.3} parent=5 // pred_check_branch
      %237 = sbr.rel (%p234) target = $region40
    $region39: #{a_call__.3} parent=5 // pred_region
      %s238 = ssub.s32 %s11, 1
      %p239 = scmp.lt.s32.totalorder %s21, 7
      %s240 = scalar_select %p239, %s21, 7
      %s241 = scalar_lea.vmem %s0, %s240
      %p242 = pneg %p49
      %p243 = pneg %p46
      %s244 = smul.u32 4, %s20
      %p245 = scmp.lt.s32.totalorder %s21, 7
      %s246 = scalar_select %p245, %s21, 7
      %p247 = scmp.lt.s32.totalorder %s244, 7
      %s248 = scalar_select %p247, %s244, 7
      %s249 = smul.addr %s246, 8
      %s250 = sadd.s32 %s248, %s249
      %s251 = smul.addr %s250, 8
      %s252 = scalar_lea.vmem %s1, %s251
      %p253 = pneg %p77
      %p254 = pneg %p74
      %p255 = pneg %p98
      %p256 = pneg %p95
      %p257 = scmp.lt.s32.totalorder %s20, 1
      %s258 = scalar_select %p257, %s20, 1
      %s259 = smul.addr %s258, 8
      %s260 = scalar_lea.vmem %s3, %s259
      %p261 = pneg %p124
      %p262 = pneg %p121
      %p263 = scmp.lt.s32.totalorder %s21, 7
      %s264 = scalar_select %p263, %s21, 7
      %s265 = scalar_lea.vmem %s4, %s264
      %p266 = pneg %p150
      %p267 = pneg %p147
      %p268 = pneg %p178
      %p269 = pneg %p175
      %s270 = smul.u32 4, %s20
      %p271 = scmp.lt.s32.totalorder %s21, 7
      %s272 = scalar_select %p271, %s21, 7
      %p273 = scmp.lt.s32.totalorder %s270, 7
      %s274 = scalar_select %p273, %s270, 7
      %s275 = smul.addr %s272, 8
      %s276 = sadd.s32 %s274, %s275
      %s277 = smul.addr %s276, 8
      %s278 = scalar_lea.vmem %s5, %s277
      %p279 = scmp.lt.s32.totalorder %s21, 7
      %s280 = scalar_select %p279, %s21, 7
      %s281 = scalar_lea.vmem %s0, %s280
      %s282 = smul.u32 4, %s20
      %p283 = scmp.lt.s32.totalorder %s21, 7
      %s284 = scalar_select %p283, %s21, 7
      %p285 = scmp.lt.s32.totalorder %s282, 7
      %s286 = scalar_select %p285, %s282, 7
      %s287 = smul.addr %s284, 8
      %s288 = sadd.s32 %s286, %s287
      %s289 = smul.addr %s288, 8
      %s290 = scalar_lea.vmem %s1, %s289
      %s291 = smul.u32 4, %s20
      %p292 = scmp.lt.s32.totalorder %s20, 1
      %s293 = scalar_select %p292, %s20, 1
      %s294 = smul.addr %s293, 8
      %s295 = scalar_lea.vmem %s3, %s294
      %p296 = scmp.lt.s32.totalorder %s21, 7
      %s297 = scalar_select %p296, %s21, 7
      %s298 = scalar_lea.vmem %s4, %s297
      %s299 = smul.u32 4, %s20
      %p300 = scmp.lt.s32.totalorder %s21, 7
      %s301 = scalar_select %p300, %s21, 7
      %p302 = scmp.lt.s32.totalorder %s299, 7
      %s303 = scalar_select %p302, %s299, 7
      %s304 = smul.addr %s301, 8
      %s305 = sadd.s32 %s303, %s304
      %s306 = smul.addr %s305, 8
      %s307 = scalar_lea.vmem %s5, %s306
      %s308 = smul.u32 4, %s20
      %v312 = vld [vmem:[%s281] sm:$0x1]
      %v313 = vld [vmem:[%s290] sm:$0xff]
      %v314 = vld [vmem:[%s290 + $0x8] sm:$0xff]
      %v315 = vld [vmem:[%s290 + $0x10] sm:$0xff]
      %v316 = vld [vmem:[%s290 + $0x18] sm:$0xff]
      %v317 = vld [vmem:[%s295] sm:$0xff]
      %vm318 = vnez %v317
      %320 = vset.pattern.permute.xlu0 0
      %321 = vperm.xlu0 %320, %v313
      %v322 = vpop.permute.xlu0 %321
      %325 = vset.pattern.permute.xlu0 0
      %326 = vperm.xlu0 %325, %v314
      %v327 = vpop.permute.xlu0 %326
      %330 = vset.pattern.permute.xlu0 0
      %331 = vperm.xlu0 %330, %v315
      %v332 = vpop.permute.xlu0 %331
      %335 = vset.pattern.permute.xlu0 0
      %336 = vperm.xlu0 %335, %v316
      %v337 = vpop.permute.xlu0 %336
      %v340 = vlaneseq
      %v341 = vshrl.u32 %v340, 7
      %v342 = vsub.s32 0, %v341
      %v343 = vrot.slane %v312, %v342
      %v345 = vadd.f32 %v322, %v343
      %v346 = vadd.f32 %v327, %v343
      %v347 = vadd.f32 %v332, %v343
      %v348 = vadd.f32 %v337, %v343
      %v349 = vmul.f32 %v345, 0.2
      %v350 = vmul.f32 %v346, 0.2
      %v351 = vmul.f32 %v347, 0.2
      %v352 = vmul.f32 %v348, 0.2
      %v353 = vmax.f32 %v345, %v349
      %v354 = vmax.f32 %v346, %v350
      %v355 = vmax.f32 %v347, %v351
      %v356 = vmax.f32 %v348, %v352
      %v357 = vsel %vm318, 16843009, 0
      %v358 = vunpack.c.0.s8 %v357
      %v359 = vunpack.c.1.s8 %v357
      %v360 = vunpack.c.2.s8 %v357
      %v361 = vunpack.c.3.s8 %v357
      %v362 = vpack.c.b16 %v358, %v358
      %v363 = vpack.c.b8 %v362, %v362
      %v364 = vpack.c.b16 %v359, %v359
      %v365 = vpack.c.b8 %v364, %v364
      %v366 = vpack.c.b16 %v360, %v360
      %v367 = vpack.c.b8 %v366, %v366
      %v368 = vpack.c.b16 %v361, %v361
      %v369 = vpack.c.b8 %v368, %v368
      %vm370 = vnez %v363
      %vm371 = vnez %v365
      %vm372 = vnez %v367
      %vm373 = vnez %v369
      %v374 = vsel %vm370, 16843009, 0
      %v375 = vsel %vm371, 16843009, 0
      %v376 = vsel %vm372, 16843009, 0
      %v377 = vsel %vm373, 16843009, 0
      %v378 = vunpack.c.0.s8 %v374
      %v379 = vunpack.c.0.s8 %v375
      %v380 = vunpack.c.0.s8 %v376
      %v381 = vunpack.c.0.s8 %v377
      %vm382 = vcmp.ne.s32.totalorder %v378, 0
      %vm383 = vcmp.ne.s32.totalorder %v379, 0
      %vm384 = vcmp.ne.s32.totalorder %v380, 0
      %vm385 = vcmp.ne.s32.totalorder %v381, 0
      %v386 = vsel %vm382, %v353, -1e+30
      %v387 = vsel %vm383, %v354, -1e+30
      %v388 = vsel %vm384, %v355, -1e+30
      %v389 = vsel %vm385, %v356, -1e+30
      %vm390 = vcmask 523264
      %v391 = vsel %vm390, %v386, -inf
      %392 = vmax.xlane.f32.xlu0 %v391
      %v393 = vpop.xlane.xlu0 %392
      %v394 = vsel %vm390, %v387, -inf
      %395 = vmax.xlane.f32.xlu0 %v394
      %v396 = vpop.xlane.xlu0 %395
      %v397 = vsel %vm390, %v388, -inf
      %398 = vmax.xlane.f32.xlu0 %v397
      %v399 = vpop.xlane.xlu0 %398
      %v400 = vsel %vm390, %v389, -inf
      %401 = vmax.xlane.f32.xlu0 %v400
      %v402 = vpop.xlane.xlu0 %401
      %v403 = vsub.f32 %v386, %v393
      %v404 = vsub.f32 %v387, %v396
      %v405 = vsub.f32 %v388, %v399
      %v406 = vsub.f32 %v389, %v402
      %v407 = vmul.f32 %v403, 1.442695
      %v408 = vpow.pop %v407
      %v409 = vmul.f32 %v404, 1.442695
      %v410 = vpow.pop %v409
      %v411 = vmul.f32 %v405, 1.442695
      %v412 = vpow.pop %v411
      %v413 = vmul.f32 %v406, 1.442695
      %v414 = vpow.pop %v413
      %v415 = vsel %vm390, %v408, 0.0
      %416 = vadd.xlane.f32.xlu0 %v415
      %v417 = vpop.xlane.xlu0 %416
      %v418 = vsel %vm390, %v410, 0.0
      %419 = vadd.xlane.f32.xlu0 %v418
      %v420 = vpop.xlane.xlu0 %419
      %v421 = vsel %vm390, %v412, 0.0
      %422 = vadd.xlane.f32.xlu0 %v421
      %v423 = vpop.xlane.xlu0 %422
      %v424 = vsel %vm390, %v414, 0.0
      %425 = vadd.xlane.f32.xlu0 %v424
      %v426 = vpop.xlane.xlu0 %425
      %v427 = vpack.c.bf16 %v410, %v408
      %v428 = vpack.c.bf16 %v414, %v412
      %s429 = smul.u32 %s21, 8
      %s430 = smul.addr %s429, 4
      %s431 = scalar_lea.vmem %s2, %s430
      %v432 = vld [vmem:[%s431] sm:$0xf]
      %v433 = vld [vmem:[%s431 + $0x4] sm:$0xf]
      %v434 = vld [vmem:[%s431 + $0x8] sm:$0xf]
      %v435 = vld [vmem:[%s431 + $0xc] sm:$0xf]
      %v436 = vld [vmem:[%s431 + $0x10] sm:$0xf]
      %v437 = vld [vmem:[%s431 + $0x14] sm:$0xf]
      %v438 = vld [vmem:[%s431 + $0x18] sm:$0xf]
      %v439 = vld [vmem:[%s431 + $0x1c] sm:$0xf]
      %v448 = vunpack.c.l.b16 %v432
      %v449 = vunpack.c.l.b16 %v433
      %v450 = vunpack.c.l.b16 %v434
      %v451 = vunpack.c.l.b16 %v435
      %v452 = vunpack.c.l.b16 %v436
      %v453 = vunpack.c.l.b16 %v437
      %v454 = vunpack.c.l.b16 %v438
      %v455 = vunpack.c.l.b16 %v439
      %v456 = vpack.c.b16 %v449, %v448
      %v457 = vpack.c.b16 %v451, %v450
      %v458 = vpack.c.b16 %v453, %v452
      %v459 = vpack.c.b16 %v455, %v454
      %v465 = vsel %vm390, %v427, 0
      %v468 = vsel %vm390, %v428, 0
      %470 = vmatprep.subr.bf16.mxu0 0
      %471 = vmatpush1.bf16.msra.mxu0 %v456
      %472 = vmatprep.subr.bf16.mxu0 0
      %473 = vmatpush1.bf16.msra.mxu0 %v457
      %474 = vmatprep.subr.bf16.mxu0 0
      %475 = vmatpush1.bf16.msra.mxu0 %v458
      %476 = vmatprep.subr.bf16.mxu0 0
      %477 = vmatpush1.bf16.msra.mxu0 %v459
      %478 = vmatprep.subr.bf16.mxu0 0
      %479 = vmatpush1.bf16.msra.mxu0 0
      %480 = vmatprep.subr.bf16.mxu0 0
      %481 = vmatpush1.bf16.msra.mxu0 0
      %482 = vmatprep.subr.bf16.mxu0 0
      %483 = vmatpush1.bf16.msra.mxu0 0
      %484 = vmatprep.subr.bf16.mxu0 0
      %485 = vmatpush1.bf16.msra.mxu0 0
      %486 = vmatprep.subr.bf16.mxu0 0
      %487 = vmatpush1.bf16.msra.mxu0 0
      %488 = vmatprep.subr.bf16.mxu0 0
      %489 = vmatpush1.bf16.msra.mxu0 0
      %490 = vmatprep.subr.bf16.mxu0 0
      %491 = vmatpush1.bf16.msra.mxu0 0
      %492 = vmatprep.subr.bf16.mxu0 0
      %493 = vmatpush1.bf16.msra.mxu0 0
      %494 = vmatprep.subr.bf16.mxu0 0
      %495 = vmatpush1.bf16.msra.mxu0 0
      %496 = vmatprep.subr.bf16.mxu0 0
      %497 = vmatpush1.bf16.msra.mxu0 0
      %498 = vmatprep.subr.bf16.mxu0 0
      %499 = vmatpush1.bf16.msra.mxu0 0
      %500 = vmatprep.subr.bf16.mxu0 0
      %501 = vmatpush1.bf16.msra.mxu0 0
      %502 = vmatprep.mubr.bf16.mxu0 0
      %503 = vmatmul.mubr.bf16.gmra.mrb[0].mxu0 %v465
      %v504 = vpop.f32.mrb[0].mxu0
      %v505 = vadd.f32 0.0, %v504
      %v506 = vpop.f32.mrb[0].mxu0
      %v507 = vpop.f32.mrb[0].mxu0
      %v508 = vadd.f32 0.0, %v507
      %v509 = vpop.f32.mrb[0].mxu0
      %510 = vmatprep.mubr.bf16.mxu0 0
      %511 = vmatmul.mubr.bf16.gmra.mrb[0].mxu0 %v468
      %v512 = vpop.f32.mrb[0].mxu0
      %v513 = vadd.f32 0.0, %v512
      %v514 = vpop.f32.mrb[0].mxu0
      %v515 = vpop.f32.mrb[0].mxu0
      %v516 = vadd.f32 0.0, %v515
      %v517 = vpop.f32.mrb[0].mxu0
      %518 = vdwg.mxu0
      %v519 = vmax.f32 %v417, 1e-20
      %v520 = vmax.f32 %v420, 1e-20
      %v521 = vmax.f32 %v423, 1e-20
      %v522 = vmax.f32 %v426, 1e-20
      %v523 = vrcp.pop %v519
      %v524 = vrcp.pop %v520
      %v525 = vrcp.pop %v521
      %v526 = vrcp.pop %v522
      %v527 = vmul.f32 %v505, %v523
      %v528 = vmul.f32 %v508, %v524
      %v529 = vmul.f32 %v513, %v525
      %v530 = vmul.f32 %v516, %v526
      %v531 = vld [vmem:[%s298] sm:$0x1]
      %v533 = vlaneseq
      %v534 = vshrl.u32 %v533, 7
      %v535 = vsub.s32 0, %v534
      %v536 = vrot.slane %v531, %v535
      %v538 = vadd.f32 %v527, %v536
      %v539 = vadd.f32 %v528, %v536
      %v540 = vadd.f32 %v529, %v536
      %v541 = vadd.f32 %v530, %v536
      %vm542 = vcmp.gt.f32.partialorder %v538, 0.0
      %vm543 = vcmp.gt.f32.partialorder %v539, 0.0
      %vm544 = vcmp.gt.f32.partialorder %v540, 0.0
      %vm545 = vcmp.gt.f32.partialorder %v541, 0.0
      %v546 = vmin.f32 %v538, 0.0
      %v547 = vmin.f32 %v539, 0.0
      %v548 = vmin.f32 %v540, 0.0
      %v549 = vmin.f32 %v541, 0.0
      %v550 = vmul.f32 %v546, 1.442695
      %v551 = vpow.pop %v550
      %v552 = vmul.f32 %v547, 1.442695
      %v553 = vpow.pop %v552
      %v554 = vmul.f32 %v548, 1.442695
      %v555 = vpow.pop %v554
      %v556 = vmul.f32 %v549, 1.442695
      %v557 = vpow.pop %v556
      %v558 = vsub.f32 %v551, 1.0
      %v559 = vsub.f32 %v553, 1.0
      %v560 = vsub.f32 %v555, 1.0
      %v561 = vsub.f32 %v557, 1.0
      %v562 = vsel %vm542, %v538, %v558
      %v563 = vsel %vm543, %v539, %v559
      %v564 = vsel %vm544, %v540, %v560
      %v565 = vsel %vm545, %v541, %v561
      %vm566 = vcmask 261120
      %567 = vst.msk [vmem:[%s307] sm:$0xff] %vm566, %v562
      %568 = vst.msk [vmem:[%s307 + $0x8] sm:$0xff] %vm566, %v563
      %569 = vst.msk [vmem:[%s307 + $0x10] sm:$0xff] %vm566, %v564
      %570 = vst.msk [vmem:[%s307 + $0x18] sm:$0xff] %vm566, %v565
      %s571 = smul.u32 4, %s20
      %p572 = scmp.lt.s32.totalorder %s21, 7
      %s573 = scalar_select %p572, %s21, 7
      %p574 = scmp.lt.s32.totalorder %s571, 7
      %s575 = scalar_select %p574, %s571, 7
      %s576 = smul.addr %s573, 8
      %s577 = sadd.s32 %s575, %s576
      %s578 = smul.addr %s577, 8
      %s579 = scalar_lea.vmem %s5, %s578
      // Predicated region
      $region41: #{a_call__.3} parent=39 // pred_check
        %p580 = pneg %p175
      $region42: #{a_call__.3} parent=39 // pred_check_branch
        %582 = sbr.rel (%p580) target = $region44
      $region43: #{a_call__.3} parent=39 // pred_region
        %s583 = smul.u32 4, %s20
      $region44: #{a_call__.3} parent=39 // pred_fallthru
        _
    $region40: #{a_call__.3} parent=5 // pred_fallthru
      _
    %p584 = scmp.le.s32.totalorder 2, %s11
    // Predicated region
    $region45: #{a_call__.3} parent=5 // pred_check
      %p585 = pneg %p584
    $region46: #{a_call__.3} parent=5 // pred_check_branch
      %587 = sbr.rel (%p585) target = $region48
    $region47: #{a_call__.3} parent=5 // pred_region
      %s588 = ssub.s32 %s11, 2
      // Predicated region
      $region49: #{a_call__.3} parent=47 // pred_check
        %p589 = pneg %p181
      $region50: #{a_call__.3} parent=47 // pred_check_branch
        %591 = sbr.rel (%p589) target = $region52
      $region51: #{a_call__.3} parent=47 // pred_region
        %s592 = smul.u32 4, %s22
        %p593 = scmp.lt.s32.totalorder %s23, 7
        %s594 = scalar_select %p593, %s23, 7
        %p595 = scmp.lt.s32.totalorder %s592, 7
        %s596 = scalar_select %p595, %s592, 7
        %s597 = smul.addr %s594, 8
        %s598 = sadd.s32 %s596, %s597
        %s599 = smul.addr %s598, 8
        %s600 = scalar_lea.vmem %s5, %s599
      $region52: #{a_call__.3} parent=47 // pred_fallthru
        _
    $region48: #{a_call__.3} parent=5 // pred_fallthru
      _
  $region6: #{a_call__.3} parent=0 // loop_footer
    %s15 = sadd.s32 1, %s11
  $region7: #{a_call__.3} parent=0 // loop_footer_branch
    %10 = sbr.rel target = $region3
  $region8: #{a_call__.3} parent=0 // loop_exit
    _

// kernel: a_call__.4
$region0: #{a_call__.4}
  #allocation0 [shape = 'u32[]', space=smem, size = 0x4, offset = 0x4, fixed_abs, tag = 'smem constant byte address 0x4 - core index']
  #allocation1 [shape = 'u32[144,128]{1,0:T(1,128)}', space=vmem, size = 0x12000, scoped, tag = 'internal scratch']
  %s0 = inlined_call_operand.vmem [shape: f32[1,1,64], index: 0, kind: input, shape index: {}]
  %s1 = inlined_call_operand.vmem [shape: f32[1,64,1], index: 1, kind: input, shape index: {}]
  %s2 = inlined_call_operand.vmem [shape: bf16[1,64,128], index: 2, kind: input, shape index: {}]
  %s3 = inlined_call_operand.vmem [shape: s8[64,64], index: 3, kind: input, shape index: {}]
  %s4 = inlined_call_operand.vmem [shape: f32[1,1,128], index: 4, kind: input, shape index: {}]
  %s5 = inlined_call_operand.vmem [shape: f32[1,64,128], index: 5, kind: output, shape index: {}]
  %s6 = sld [smem:[#allocation0]]
  $region65: #{a_call__.4} parent=0
    _
  %s8 = ssub.s32 1, %s6
  %s9 = scalar_select 0, %s8, %s6
  loop: start=0, step=1, limit=4
  $region2: #{a_call__.4} parent=0 // loop_pre_header
    _
  $region3: #{a_call__.4} parent=0 // loop_header
    %s11 = sphi 0, %s15
    %p12 = scmp.ge.s32.totalorder %s11, 4
    %s18 = sphi 0, %s30
    %s19 = sphi 0, %s26
    %s20 = sphi 0, %s18
    %s21 = sphi 0, %s19
    %s22 = sphi 0, %s20
    %s23 = sphi 0, %s21
    %s33 = sphi 0, %s35
    %s36 = sphi 0, %s33
    %s37 = sphi 0, %s36
    %s53 = sphi 0, %s37
    %s61 = sphi 0, %s63
    %s64 = sphi 0, %s61
    %s65 = sphi 0, %s64
    %s81 = sphi 0, %s65
    %s85 = sphi 0, %s85
    %s87 = sphi 0, %s85
    %s88 = sphi 0, %s87
    %s102 = sphi 0, %s88
    %s108 = sphi 0, %s110
    %s111 = sphi 0, %s108
    %s112 = sphi 0, %s111
    %s128 = sphi 0, %s112
    %s132 = sphi 0, %s132
    %s134 = sphi 0, %s132
    %s135 = sphi 0, %s134
    %s149 = sphi 0, %s135
    %s155 = sphi 0, %s157
    %s158 = sphi 0, %s155
    %s159 = sphi 0, %s158
    %s175 = sphi 0, %s159
  $region4: #{a_call__.4} parent=0 // loop_header_branch
    %14 = sbr.rel (%p12) target = $region8
  $region5: #{a_call__.4} parent=0 // loop_body
    %s16 = ssub.s32 %s11, 1
    %s17 = ssub.s32 %s11, 2
    %s24 = sadd.s32 1, %s19
    %p25 = scmp.ge.s32.totalorder %s24, 1
    %s26 = scalar_select %p25, 0, %s24
    %s27 = sadd.s32 1, %s18
    %s28 = scalar_select %p25, %s27, %s18
    %p29 = scmp.ge.s32.totalorder %s28, 2
    %s30 = scalar_select %p29, 0, %s28
    %s31 = ssub.s32 %s19, %s26
    %p32 = scmp.eq.s32.totalorder %s31, 0
    %s34 = sadd.s32 %s33, 1
    %s35 = scalar_select %p32, %s33, %s34
    %p38 = pneg %p32
    %p39 = scmp.eq.s32.totalorder %s11, 1
    %p40 = por %p38, %p39
    %p41 = scmp.ne.s32.totalorder %s33, %s36
    %p42 = scmp.eq.s32.totalorder %s11, 0
    %p43 = por %p41, %p42
    %p44 = scmp.ne.s32.totalorder %s33, %s36
    %p45 = scmp.eq.s32.totalorder %s16, 1
    %p46 = por %p44, %p45
    %p47 = scmp.ne.s32.totalorder %s36, %s37
    %p48 = scmp.eq.s32.totalorder %s16, 0
    %p49 = por %p47, %p48
    %p50 = scmp.ne.s32.totalorder %s36, %s37
    %p51 = scmp.eq.s32.totalorder %s17, 1
    %p52 = por %p50, %p51
    %p54 = scmp.ne.s32.totalorder %s37, %s53
    %p55 = scmp.eq.s32.totalorder %s17, 0
    %p56 = por %p54, %p55
    %s57 = ssub.s32 %s19, %s26
    %s58 = ssub.s32 %s18, %s30
    %s59 = sor.u32 %s57, %s58
    %p60 = scmp.eq.s32.totalorder %s59, 0
    %s62 = sadd.s32 %s61, 1
    %s63 = scalar_select %p60, %s61, %s62
    %p66 = pneg %p60
    %p67 = scmp.eq.s32.totalorder %s11, 1
    %p68 = por %p66, %p67
    %p69 = scmp.ne.s32.totalorder %s61, %s64
    %p70 = scmp.eq.s32.totalorder %s11, 0
    %p71 = por %p69, %p70
    %p72 = scmp.ne.s32.totalorder %s61, %s64
    %p73 = scmp.eq.s32.totalorder %s16, 1
    %p74 = por %p72, %p73
    %p75 = scmp.ne.s32.totalorder %s64, %s65
    %p76 = scmp.eq.s32.totalorder %s16, 0
    %p77 = por %p75, %p76
    %p78 = scmp.ne.s32.totalorder %s64, %s65
    %p79 = scmp.eq.s32.totalorder %s17, 1
    %p80 = por %p78, %p79
    %p82 = scmp.ne.s32.totalorder %s65, %s81
    %p83 = scmp.eq.s32.totalorder %s17, 0
    %p84 = por %p82, %p83
    %s86 = sadd.s32 %s85, 1
    %p89 = scmp.eq.s32.totalorder %s11, 1
    %p90 = scmp.ne.s32.totalorder %s85, %s87
    %p91 = scmp.eq.s32.totalorder %s11, 0
    %p92 = por %p90, %p91
    %p93 = scmp.ne.s32.totalorder %s85, %s87
    %p94 = scmp.eq.s32.totalorder %s16, 1
    %p95 = por %p93, %p94
    %p96 = scmp.ne.s32.totalorder %s87, %s88
    %p97 = scmp.eq.s32.totalorder %s16, 0
    %p98 = por %p96, %p97
    %p99 = scmp.ne.s32.totalorder %s87, %s88
    %p100 = scmp.eq.s32.totalorder %s17, 1
    %p101 = por %p99, %p100
    %p103 = scmp.ne.s32.totalorder %s88, %s102
    %p104 = scmp.eq.s32.totalorder %s17, 0
    %p105 = por %p103, %p104
    %s106 = ssub.s32 %s18, %s30
    %p107 = scmp.eq.s32.totalorder %s106, 0
    %s109 = sadd.s32 %s108, 1
    %s110 = scalar_select %p107, %s108, %s109
    %p113 = pneg %p107
    %p114 = scmp.eq.s32.totalorder %s11, 1
    %p115 = por %p113, %p114
    %p116 = scmp.ne.s32.totalorder %s108, %s111
    %p117 = scmp.eq.s32.totalorder %s11, 0
    %p118 = por %p116, %p117
    %p119 = scmp.ne.s32.totalorder %s108, %s111
    %p120 = scmp.eq.s32.totalorder %s16, 1
    %p121 = por %p119, %p120
    %p122 = scmp.ne.s32.totalorder %s111, %s112
    %p123 = scmp.eq.s32.totalorder %s16, 0
    %p124 = por %p122, %p123
    %p125 = scmp.ne.s32.totalorder %s111, %s112
    %p126 = scmp.eq.s32.totalorder %s17, 1
    %p127 = por %p125, %p126
    %p129 = scmp.ne.s32.totalorder %s112, %s128
    %p130 = scmp.eq.s32.totalorder %s17, 0
    %p131 = por %p129, %p130
    %s133 = sadd.s32 %s132, 1
    %p136 = scmp.eq.s32.totalorder %s11, 1
    %p137 = scmp.ne.s32.totalorder %s132, %s134
    %p138 = scmp.eq.s32.totalorder %s11, 0
    %p139 = por %p137, %p138
    %p140 = scmp.ne.s32.totalorder %s132, %s134
    %p141 = scmp.eq.s32.totalorder %s16, 1
    %p142 = por %p140, %p141
    %p143 = scmp.ne.s32.totalorder %s134, %s135
    %p144 = scmp.eq.s32.totalorder %s16, 0
    %p145 = por %p143, %p144
    %p146 = scmp.ne.s32.totalorder %s134, %s135
    %p147 = scmp.eq.s32.totalorder %s17, 1
    %p148 = por %p146, %p147
    %p150 = scmp.ne.s32.totalorder %s135, %s149
    %p151 = scmp.eq.s32.totalorder %s17, 0
    %p152 = por %p150, %p151
    %s153 = ssub.s32 %s18, %s30
    %p154 = scmp.eq.s32.totalorder %s153, 0
    %s156 = sadd.s32 %s155, 1
    %s157 = scalar_select %p154, %s155, %s156
    %p160 = pneg %p154
    %p161 = scmp.eq.s32.totalorder %s11, 1
    %p162 = por %p160, %p161
    %p163 = scmp.ne.s32.totalorder %s155, %s158
    %p164 = scmp.eq.s32.totalorder %s11, 0
    %p165 = por %p163, %p164
    %p166 = scmp.ne.s32.totalorder %s155, %s158
    %p167 = scmp.eq.s32.totalorder %s16, 1
    %p168 = por %p166, %p167
    %p169 = scmp.ne.s32.totalorder %s158, %s159
    %p170 = scmp.eq.s32.totalorder %s16, 0
    %p171 = por %p169, %p170
    %p172 = scmp.ne.s32.totalorder %s158, %s159
    %p173 = scmp.eq.s32.totalorder %s17, 1
    %p174 = por %p172, %p173
    %p176 = scmp.ne.s32.totalorder %s159, %s175
    %p177 = scmp.eq.s32.totalorder %s17, 0
    %p178 = por %p176, %p177
    %p179 = scmp.le.s32.totalorder 1, %s11
    %p180 = scmp.lt.s32.totalorder %s11, 3
    %p181 = pnand %p179, %p180
    %p182 = pneg %p181
    // Predicated region
    $region9: #{a_call__.4} parent=5 // pred_check
      _
    $region10: #{a_call__.4} parent=5 // pred_check_branch
      %184 = sbr.rel (%p181) target = $region12
    $region11: #{a_call__.4} parent=5 // pred_region
      %s185 = ssub.s32 %s11, 1
      // Predicated region
      $region13: #{a_call__.4} parent=11 // pred_check
        %p186 = pneg %p49
      $region14: #{a_call__.4} parent=11 // pred_check_branch
        %188 = sbr.rel (%p186) target = $region16
      $region15: #{a_call__.4} parent=11 // pred_region
        %p189 = scmp.lt.s32.totalorder %s21, 0
        %s190 = scalar_select %p189, %s21, 0
        %s191 = scalar_lea.vmem %s0, %s190
      $region16: #{a_call__.4} parent=11 // pred_fallthru
        _
      // Predicated region
      $region17: #{a_call__.4} parent=11 // pred_check
        %p192 = pneg %p98
      $region18: #{a_call__.4} parent=11 // pred_check_branch
        %194 = sbr.rel (%p192) target = $region20
      $region19: #{a_call__.4} parent=11 // pred_region
        _
      $region20: #{a_call__.4} parent=11 // pred_fallthru
        _
      // Predicated region
      $region21: #{a_call__.4} parent=11 // pred_check
        %p195 = pneg %p145
      $region22: #{a_call__.4} parent=11 // pred_check_branch
        %197 = sbr.rel (%p195) target = $region24
      $region23: #{a_call__.4} parent=11 // pred_region
        _
      $region24: #{a_call__.4} parent=11 // pred_fallthru
        _
    $region12: #{a_call__.4} parent=5 // pred_fallthru
      _
    %p198 = scmp.lt.s32.totalorder %s11, 2
    // Predicated region
    $region25: #{a_call__.4} parent=5 // pred_check
      %p199 = pneg %p198
    $region26: #{a_call__.4} parent=5 // pred_check_branch
      %201 = sbr.rel (%p199) target = $region28
    $region27: #{a_call__.4} parent=5 // pred_region
      // Predicated region
      $region29: #{a_call__.4} parent=27 // pred_check
        %p202 = pneg %p71
      $region30: #{a_call__.4} parent=27 // pred_check_branch
        %204 = sbr.rel (%p202) target = $region32
      $region31: #{a_call__.4} parent=27 // pred_region
        %s205 = smul.u32 4, %s18
        %p206 = scmp.lt.s32.totalorder %s19, 0
        %s207 = scalar_select %p206, %s19, 0
        %p208 = scmp.lt.s32.totalorder %s205, 7
        %s209 = scalar_select %p208, %s205, 7
        %s210 = smul.addr %s207, 8
        %s211 = sadd.s32 %s209, %s210
        %s212 = smul.addr %s211, 8
        %s213 = scalar_lea.vmem %s1, %s212
        %s214 = smul.u32 4, %s18
      $region32: #{a_call__.4} parent=27 // pred_fallthru
        _
      // Predicated region
      $region33: #{a_call__.4} parent=27 // pred_check
        %p215 = pneg %p118
      $region34: #{a_call__.4} parent=27 // pred_check_branch
        %217 = sbr.rel (%p215) target = $region36
      $region35: #{a_call__.4} parent=27 // pred_region
        %p218 = scmp.lt.s32.totalorder %s18, 1
        %s219 = scalar_select %p218, %s18, 1
        %s220 = smul.addr %s219, 8
        %s221 = scalar_lea.vmem %s3, %s220
      $region36: #{a_call__.4} parent=27 // pred_fallthru
        _
    $region28: #{a_call__.4} parent=5 // pred_fallthru
      _
    %p222 = scmp.le.s32.totalorder 1, %s11
    %p223 = scmp.lt.s32.totalorder %s11, 3
    %p224 = pnand %p222, %p223
    %p225 = pneg %p224
    // Predicated region
    $region37: #{a_call__.4} parent=5 // pred_check
      _
    $region38: #{a_call__.4} parent=5 // pred_check_branch
      %227 = sbr.rel (%p224) target = $region40
    $region39: #{a_call__.4} parent=5 // pred_region
      %s228 = ssub.s32 %s11, 1
      %p229 = scmp.lt.s32.totalorder %s21, 0
      %s230 = scalar_select %p229, %s21, 0
      %s231 = scalar_lea.vmem %s0, %s230
      %p232 = pneg %p49
      %p233 = pneg %p46
      %s234 = smul.u32 4, %s20
      %p235 = scmp.lt.s32.totalorder %s21, 0
      %s236 = scalar_select %p235, %s21, 0
      %p237 = scmp.lt.s32.totalorder %s234, 7
      %s238 = scalar_select %p237, %s234, 7
      %s239 = smul.addr %s236, 8
      %s240 = sadd.s32 %s238, %s239
      %s241 = smul.addr %s240, 8
      %s242 = scalar_lea.vmem %s1, %s241
      %p243 = pneg %p77
      %p244 = pneg %p74
      %p245 = pneg %p98
      %p246 = pneg %p95
      %p247 = scmp.lt.s32.totalorder %s20, 1
      %s248 = scalar_select %p247, %s20, 1
      %s249 = smul.addr %s248, 8
      %s250 = scalar_lea.vmem %s3, %s249
      %p251 = pneg %p124
      %p252 = pneg %p121
      %p253 = pneg %p145
      %p254 = pneg %p142
      %p255 = pneg %p171
      %p256 = pneg %p168
      %s257 = smul.u32 4, %s20
      %p258 = scmp.lt.s32.totalorder %s257, 7
      %s259 = scalar_select %p258, %s257, 7
      %s260 = smul.addr %s259, 8
      %s261 = scalar_lea.vmem %s5, %s260
      %p262 = scmp.lt.s32.totalorder %s21, 0
      %s263 = scalar_select %p262, %s21, 0
      %s264 = scalar_lea.vmem %s0, %s263
      %s265 = smul.u32 4, %s20
      %p266 = scmp.lt.s32.totalorder %s21, 0
      %s267 = scalar_select %p266, %s21, 0
      %p268 = scmp.lt.s32.totalorder %s265, 7
      %s269 = scalar_select %p268, %s265, 7
      %s270 = smul.addr %s267, 8
      %s271 = sadd.s32 %s269, %s270
      %s272 = smul.addr %s271, 8
      %s273 = scalar_lea.vmem %s1, %s272
      %s274 = smul.u32 4, %s20
      %p275 = scmp.lt.s32.totalorder %s20, 1
      %s276 = scalar_select %p275, %s20, 1
      %s277 = smul.addr %s276, 8
      %s278 = scalar_lea.vmem %s3, %s277
      %s279 = smul.u32 4, %s20
      %p280 = scmp.lt.s32.totalorder %s279, 7
      %s281 = scalar_select %p280, %s279, 7
      %s282 = smul.addr %s281, 8
      %s283 = scalar_lea.vmem %s5, %s282
      %s284 = smul.u32 4, %s20
      %v288 = vld [vmem:[%s264] sm:$0x1]
      %v289 = vld [vmem:[%s273] sm:$0xff]
      %v290 = vld [vmem:[%s273 + $0x8] sm:$0xff]
      %v291 = vld [vmem:[%s273 + $0x10] sm:$0xff]
      %v292 = vld [vmem:[%s273 + $0x18] sm:$0xff]
      %v293 = vld [vmem:[%s278] sm:$0xff]
      %vm294 = vnez %v293
      %296 = vset.pattern.permute.xlu0 0
      %297 = vperm.xlu0 %296, %v289
      %v298 = vpop.permute.xlu0 %297
      %301 = vset.pattern.permute.xlu0 0
      %302 = vperm.xlu0 %301, %v290
      %v303 = vpop.permute.xlu0 %302
      %306 = vset.pattern.permute.xlu0 0
      %307 = vperm.xlu0 %306, %v291
      %v308 = vpop.permute.xlu0 %307
      %311 = vset.pattern.permute.xlu0 0
      %312 = vperm.xlu0 %311, %v292
      %v313 = vpop.permute.xlu0 %312
      %v316 = vlaneseq
      %v317 = vshrl.u32 %v316, 7
      %v318 = vsub.s32 0, %v317
      %v319 = vrot.slane %v288, %v318
      %v321 = vadd.f32 %v298, %v319
      %v322 = vadd.f32 %v303, %v319
      %v323 = vadd.f32 %v308, %v319
      %v324 = vadd.f32 %v313, %v319
      %v325 = vmul.f32 %v321, 0.2
      %v326 = vmul.f32 %v322, 0.2
      %v327 = vmul.f32 %v323, 0.2
      %v328 = vmul.f32 %v324, 0.2
      %v329 = vmax.f32 %v321, %v325
      %v330 = vmax.f32 %v322, %v326
      %v331 = vmax.f32 %v323, %v327
      %v332 = vmax.f32 %v324, %v328
      %v333 = vsel %vm294, 16843009, 0
      %v334 = vunpack.c.0.s8 %v333
      %v335 = vunpack.c.1.s8 %v333
      %v336 = vunpack.c.2.s8 %v333
      %v337 = vunpack.c.3.s8 %v333
      %v338 = vpack.c.b16 %v334, %v334
      %v339 = vpack.c.b8 %v338, %v338
      %v340 = vpack.c.b16 %v335, %v335
      %v341 = vpack.c.b8 %v340, %v340
      %v342 = vpack.c.b16 %v336, %v336
      %v343 = vpack.c.b8 %v342, %v342
      %v344 = vpack.c.b16 %v337, %v337
      %v345 = vpack.c.b8 %v344, %v344
      %vm346 = vnez %v339
      %vm347 = vnez %v341
      %vm348 = vnez %v343
      %vm349 = vnez %v345
      %v350 = vsel %vm346, 16843009, 0
      %v351 = vsel %vm347, 16843009, 0
      %v352 = vsel %vm348, 16843009, 0
      %v353 = vsel %vm349, 16843009, 0
      %v354 = vunpack.c.0.s8 %v350
      %v355 = vunpack.c.0.s8 %v351
      %v356 = vunpack.c.0.s8 %v352
      %v357 = vunpack.c.0.s8 %v353
      %vm358 = vcmp.ne.s32.totalorder %v354, 0
      %vm359 = vcmp.ne.s32.totalorder %v355, 0
      %vm360 = vcmp.ne.s32.totalorder %v356, 0
      %vm361 = vcmp.ne.s32.totalorder %v357, 0
      %v362 = vsel %vm358, %v329, -1e+30
      %v363 = vsel %vm359, %v330, -1e+30
      %v364 = vsel %vm360, %v331, -1e+30
      %v365 = vsel %vm361, %v332, -1e+30
      %vm366 = vcmask 523264
      %v367 = vsel %vm366, %v362, -inf
      %368 = vmax.xlane.f32.xlu0 %v367
      %v369 = vpop.xlane.xlu0 %368
      %v370 = vsel %vm366, %v363, -inf
      %371 = vmax.xlane.f32.xlu0 %v370
      %v372 = vpop.xlane.xlu0 %371
      %v373 = vsel %vm366, %v364, -inf
      %374 = vmax.xlane.f32.xlu0 %v373
      %v375 = vpop.xlane.xlu0 %374
      %v376 = vsel %vm366, %v365, -inf
      %377 = vmax.xlane.f32.xlu0 %v376
      %v378 = vpop.xlane.xlu0 %377
      %v379 = vsub.f32 %v362, %v369
      %v380 = vsub.f32 %v363, %v372
      %v381 = vsub.f32 %v364, %v375
      %v382 = vsub.f32 %v365, %v378
      %v383 = vmul.f32 %v379, 1.442695
      %v384 = vpow.pop %v383
      %v385 = vmul.f32 %v380, 1.442695
      %v386 = vpow.pop %v385
      %v387 = vmul.f32 %v381, 1.442695
      %v388 = vpow.pop %v387
      %v389 = vmul.f32 %v382, 1.442695
      %v390 = vpow.pop %v389
      %v391 = vsel %vm366, %v384, 0.0
      %392 = vadd.xlane.f32.xlu0 %v391
      %v393 = vpop.xlane.xlu0 %392
      %v394 = vsel %vm366, %v386, 0.0
      %395 = vadd.xlane.f32.xlu0 %v394
      %v396 = vpop.xlane.xlu0 %395
      %v397 = vsel %vm366, %v388, 0.0
      %398 = vadd.xlane.f32.xlu0 %v397
      %v399 = vpop.xlane.xlu0 %398
      %v400 = vsel %vm366, %v390, 0.0
      %401 = vadd.xlane.f32.xlu0 %v400
      %v402 = vpop.xlane.xlu0 %401
      %v403 = vpack.c.bf16 %v386, %v384
      %v404 = vpack.c.bf16 %v390, %v388
      %s405 = smul.u32 %s21, 8
      %s406 = smul.addr %s405, 4
      %s407 = scalar_lea.vmem %s2, %s406
      %v408 = vld [vmem:[%s407] sm:$0xf]
      %v409 = vld [vmem:[%s407 + $0x4] sm:$0xf]
      %v410 = vld [vmem:[%s407 + $0x8] sm:$0xf]
      %v411 = vld [vmem:[%s407 + $0xc] sm:$0xf]
      %v412 = vld [vmem:[%s407 + $0x10] sm:$0xf]
      %v413 = vld [vmem:[%s407 + $0x14] sm:$0xf]
      %v414 = vld [vmem:[%s407 + $0x18] sm:$0xf]
      %v415 = vld [vmem:[%s407 + $0x1c] sm:$0xf]
      %v424 = vunpack.c.l.b16 %v408
      %v425 = vunpack.c.l.b16 %v409
      %v426 = vunpack.c.l.b16 %v410
      %v427 = vunpack.c.l.b16 %v411
      %v428 = vunpack.c.l.b16 %v412
      %v429 = vunpack.c.l.b16 %v413
      %v430 = vunpack.c.l.b16 %v414
      %v431 = vunpack.c.l.b16 %v415
      %v432 = vpack.c.b16 %v425, %v424
      %v433 = vpack.c.b16 %v427, %v426
      %v434 = vpack.c.b16 %v429, %v428
      %v435 = vpack.c.b16 %v431, %v430
      %v441 = vsel %vm366, %v403, 0
      %v444 = vsel %vm366, %v404, 0
      %446 = vmatprep.subr.bf16.mxu0 0
      %447 = vmatpush1.bf16.msra.mxu0 %v432
      %448 = vmatprep.subr.bf16.mxu0 0
      %449 = vmatpush1.bf16.msra.mxu0 %v433
      %450 = vmatprep.subr.bf16.mxu0 0
      %451 = vmatpush1.bf16.msra.mxu0 %v434
      %452 = vmatprep.subr.bf16.mxu0 0
      %453 = vmatpush1.bf16.msra.mxu0 %v435
      %454 = vmatprep.subr.bf16.mxu0 0
      %455 = vmatpush1.bf16.msra.mxu0 0
      %456 = vmatprep.subr.bf16.mxu0 0
      %457 = vmatpush1.bf16.msra.mxu0 0
      %458 = vmatprep.subr.bf16.mxu0 0
      %459 = vmatpush1.bf16.msra.mxu0 0
      %460 = vmatprep.subr.bf16.mxu0 0
      %461 = vmatpush1.bf16.msra.mxu0 0
      %462 = vmatprep.subr.bf16.mxu0 0
      %463 = vmatpush1.bf16.msra.mxu0 0
      %464 = vmatprep.subr.bf16.mxu0 0
      %465 = vmatpush1.bf16.msra.mxu0 0
      %466 = vmatprep.subr.bf16.mxu0 0
      %467 = vmatpush1.bf16.msra.mxu0 0
      %468 = vmatprep.subr.bf16.mxu0 0
      %469 = vmatpush1.bf16.msra.mxu0 0
      %470 = vmatprep.subr.bf16.mxu0 0
      %471 = vmatpush1.bf16.msra.mxu0 0
      %472 = vmatprep.subr.bf16.mxu0 0
      %473 = vmatpush1.bf16.msra.mxu0 0
      %474 = vmatprep.subr.bf16.mxu0 0
      %475 = vmatpush1.bf16.msra.mxu0 0
      %476 = vmatprep.subr.bf16.mxu0 0
      %477 = vmatpush1.bf16.msra.mxu0 0
      %478 = vmatprep.mubr.bf16.mxu0 0
      %479 = vmatmul.mubr.bf16.gmra.mrb[0].mxu0 %v441
      %v480 = vpop.f32.mrb[0].mxu0
      %v481 = vadd.f32 0.0, %v480
      %v482 = vpop.f32.mrb[0].mxu0
      %v483 = vpop.f32.mrb[0].mxu0
      %v484 = vadd.f32 0.0, %v483
      %v485 = vpop.f32.mrb[0].mxu0
      %486 = vmatprep.mubr.bf16.mxu0 0
      %487 = vmatmul.mubr.bf16.gmra.mrb[0].mxu0 %v444
      %v488 = vpop.f32.mrb[0].mxu0
      %v489 = vadd.f32 0.0, %v488
      %v490 = vpop.f32.mrb[0].mxu0
      %v491 = vpop.f32.mrb[0].mxu0
      %v492 = vadd.f32 0.0, %v491
      %v493 = vpop.f32.mrb[0].mxu0
      %494 = vdwg.mxu0
      %v495 = vmax.f32 %v393, 1e-20
      %v496 = vmax.f32 %v396, 1e-20
      %v497 = vmax.f32 %v399, 1e-20
      %v498 = vmax.f32 %v402, 1e-20
      %v499 = vrcp.pop %v495
      %v500 = vrcp.pop %v496
      %v501 = vrcp.pop %v497
      %v502 = vrcp.pop %v498
      %v503 = vmul.f32 %v481, %v499
      %v504 = vmul.f32 %v484, %v500
      %v505 = vmul.f32 %v489, %v501
      %v506 = vmul.f32 %v492, %v502
      %p507 = scmp.eq.s32.totalorder %s21, 0
      // Predicated region
      $region41: #{a_call__.4} parent=39 // pred_check
        %p508 = pneg %p507
      $region42: #{a_call__.4} parent=39 // pred_check_branch
        %510 = sbr.rel (%p508) target = $region44
      $region43: #{a_call__.4} parent=39 // pred_region
        %511 = vst [vmem:[%s283] sm:$0xff] %v503
        %512 = vst [vmem:[%s283 + $0x8] sm:$0xff] %v504
        %513 = vst [vmem:[%s283 + $0x10] sm:$0xff] %v505
        %514 = vst [vmem:[%s283 + $0x18] sm:$0xff] %v506
      $region44: #{a_call__.4} parent=39 // pred_fallthru
        _
      %p515 = scmp.gt.s32.totalorder %s21, 0
      // Predicated region
      $region45: #{a_call__.4} parent=39 // pred_check
        %p516 = pneg %p515
      $region46: #{a_call__.4} parent=39 // pred_check_branch
        %518 = sbr.rel (%p516) target = $region48
      $region47: #{a_call__.4} parent=39 // pred_region
        %v519 = vld [vmem:[%s283] sm:$0xff]
        %v520 = vld [vmem:[%s283 + $0x8] sm:$0xff]
        %v521 = vld [vmem:[%s283 + $0x10] sm:$0xff]
        %v522 = vld [vmem:[%s283 + $0x18] sm:$0xff]
        %v523 = vadd.f32 %v519, %v503
        %v524 = vadd.f32 %v520, %v504
        %v525 = vadd.f32 %v521, %v505
        %v526 = vadd.f32 %v522, %v506
        %527 = vst [vmem:[%s283] sm:$0xff] %v523
        %528 = vst [vmem:[%s283 + $0x8] sm:$0xff] %v524
        %529 = vst [vmem:[%s283 + $0x10] sm:$0xff] %v525
        %530 = vst [vmem:[%s283 + $0x18] sm:$0xff] %v526
      $region48: #{a_call__.4} parent=39 // pred_fallthru
        _
      // Predicated region
      $region49: #{a_call__.4} parent=39 // pred_check
        %p531 = pneg %p507
      $region50: #{a_call__.4} parent=39 // pred_check_branch
        %533 = sbr.rel (%p531) target = $region52
      $region51: #{a_call__.4} parent=39 // pred_region
        %v534 = vld [vmem:[%s283] sm:$0xff]
        %v535 = vld [vmem:[%s283 + $0x8] sm:$0xff]
        %v536 = vld [vmem:[%s283 + $0x10] sm:$0xff]
        %v537 = vld [vmem:[%s283 + $0x18] sm:$0xff]
        %v538 = vld [vmem:[%s4] sm:$0x1]
        %v540 = vlaneseq
        %v541 = vshrl.u32 %v540, 7
        %v542 = vsub.s32 0, %v541
        %v543 = vrot.slane %v538, %v542
        %v545 = vadd.f32 %v534, %v543
        %v546 = vadd.f32 %v535, %v543
        %v547 = vadd.f32 %v536, %v543
        %v548 = vadd.f32 %v537, %v543
        %vm549 = vcmp.gt.f32.partialorder %v545, 0.0
        %vm550 = vcmp.gt.f32.partialorder %v546, 0.0
        %vm551 = vcmp.gt.f32.partialorder %v547, 0.0
        %vm552 = vcmp.gt.f32.partialorder %v548, 0.0
        %v553 = vmin.f32 %v545, 0.0
        %v554 = vmin.f32 %v546, 0.0
        %v555 = vmin.f32 %v547, 0.0
        %v556 = vmin.f32 %v548, 0.0
        %v557 = vmul.f32 %v553, 1.442695
        %v558 = vpow.pop %v557
        %v559 = vmul.f32 %v554, 1.442695
        %v560 = vpow.pop %v559
        %v561 = vmul.f32 %v555, 1.442695
        %v562 = vpow.pop %v561
        %v563 = vmul.f32 %v556, 1.442695
        %v564 = vpow.pop %v563
        %v565 = vsub.f32 %v558, 1.0
        %v566 = vsub.f32 %v560, 1.0
        %v567 = vsub.f32 %v562, 1.0
        %v568 = vsub.f32 %v564, 1.0
        %v569 = vsel %vm549, %v545, %v565
        %v570 = vsel %vm550, %v546, %v566
        %v571 = vsel %vm551, %v547, %v567
        %v572 = vsel %vm552, %v548, %v568
        %573 = vst [vmem:[%s283] sm:$0xff] %v569
        %574 = vst [vmem:[%s283 + $0x8] sm:$0xff] %v570
        %575 = vst [vmem:[%s283 + $0x10] sm:$0xff] %v571
        %576 = vst [vmem:[%s283 + $0x18] sm:$0xff] %v572
      $region52: #{a_call__.4} parent=39 // pred_fallthru
        _
      %s577 = smul.u32 4, %s20
      %p578 = scmp.lt.s32.totalorder %s577, 7
      %s579 = scalar_select %p578, %s577, 7
      %s580 = smul.addr %s579, 8
      %s581 = scalar_lea.vmem %s5, %s580
      // Predicated region
      $region53: #{a_call__.4} parent=39 // pred_check
        %p582 = pneg %p168
      $region54: #{a_call__.4} parent=39 // pred_check_branch
        %584 = sbr.rel (%p582) target = $region56
      $region55: #{a_call__.4} parent=39 // pred_region
        %s585 = smul.u32 4, %s20
      $region56: #{a_call__.4} parent=39 // pred_fallthru
        _
    $region40: #{a_call__.4} parent=5 // pred_fallthru
      _
    %p586 = scmp.le.s32.totalorder 2, %s11
    // Predicated region
    $region57: #{a_call__.4} parent=5 // pred_check
      %p587 = pneg %p586
    $region58: #{a_call__.4} parent=5 // pred_check_branch
      %589 = sbr.rel (%p587) target = $region60
    $region59: #{a_call__.4} parent=5 // pred_region
      %s590 = ssub.s32 %s11, 2
      // Predicated region
      $region61: #{a_call__.4} parent=59 // pred_check
        %p591 = pneg %p174
      $region62: #{a_call__.4} parent=59 // pred_check_branch
        %593 = sbr.rel (%p591) target = $region64
      $region63: #{a_call__.4} parent=59 // pred_region
        %s594 = smul.u32 4, %s22
        %p595 = scmp.lt.s32.totalorder %s594, 7
        %s596 = scalar_select %p595, %s594, 7
        %s597 = smul.addr %s596, 8
        %s598 = scalar_lea.vmem %s5, %s597
      $region64: #{a_call__.4} parent=59 // pred_fallthru
        _
    $region60: #{a_call__.4} parent=5 // pred_fallthru
      _
  $region6: #{a_call__.4} parent=0 // loop_footer
    %s15 = sadd.s32 1, %s11
  $region7: #{a_call__.4} parent=0 // loop_footer_branch
    %10 = sbr.rel target = $region3
  $region8: #{a_call__.4} parent=0 // loop_exit
    _

// kernel: a_call__.5
$region0: #{a_call__.5}
  #allocation0 [shape = 'u32[]', space=smem, size = 0x4, offset = 0x4, fixed_abs, tag = 'smem constant byte address 0x4 - core index']
  #allocation1 [shape = 'u32[144,128]{1,0:T(1,128)}', space=vmem, size = 0x12000, scoped, tag = 'internal scratch']
  %s0 = inlined_call_operand.vmem [shape: f32[1,1,64], index: 0, kind: input, shape index: {}]
  %s1 = inlined_call_operand.vmem [shape: f32[1,64,1], index: 1, kind: input, shape index: {}]
  %s2 = inlined_call_operand.vmem [shape: bf16[1,64,128], index: 2, kind: input, shape index: {}]
  %s3 = inlined_call_operand.vmem [shape: s8[64,64], index: 3, kind: input, shape index: {}]
  %s4 = inlined_call_operand.vmem [shape: f32[1,1,128], index: 4, kind: input, shape index: {}]
  %s5 = inlined_call_operand.vmem [shape: f32[1,64,128], index: 5, kind: output, shape index: {}]
  %s6 = sld [smem:[#allocation0]]
  $region65: #{a_call__.5} parent=0
    _
  %s8 = ssub.s32 1, %s6
  %s9 = scalar_select 0, %s8, %s6
  loop: start=0, step=1, limit=4
  $region2: #{a_call__.5} parent=0 // loop_pre_header
    _
  $region3: #{a_call__.5} parent=0 // loop_header
    %s11 = sphi 0, %s15
    %p12 = scmp.ge.s32.totalorder %s11, 4
    %s18 = sphi 0, %s30
    %s19 = sphi 0, %s26
    %s20 = sphi 0, %s18
    %s21 = sphi 0, %s19
    %s22 = sphi 0, %s20
    %s23 = sphi 0, %s21
    %s33 = sphi 0, %s35
    %s36 = sphi 0, %s33
    %s37 = sphi 0, %s36
    %s53 = sphi 0, %s37
    %s61 = sphi 0, %s63
    %s64 = sphi 0, %s61
    %s65 = sphi 0, %s64
    %s81 = sphi 0, %s65
    %s85 = sphi 0, %s85
    %s87 = sphi 0, %s85
    %s88 = sphi 0, %s87
    %s102 = sphi 0, %s88
    %s108 = sphi 0, %s110
    %s111 = sphi 0, %s108
    %s112 = sphi 0, %s111
    %s128 = sphi 0, %s112
    %s132 = sphi 0, %s132
    %s134 = sphi 0, %s132
    %s135 = sphi 0, %s134
    %s149 = sphi 0, %s135
    %s155 = sphi 0, %s157
    %s158 = sphi 0, %s155
    %s159 = sphi 0, %s158
    %s175 = sphi 0, %s159
  $region4: #{a_call__.5} parent=0 // loop_header_branch
    %14 = sbr.rel (%p12) target = $region8
  $region5: #{a_call__.5} parent=0 // loop_body
    %s16 = ssub.s32 %s11, 1
    %s17 = ssub.s32 %s11, 2
    %s24 = sadd.s32 1, %s19
    %p25 = scmp.ge.s32.totalorder %s24, 1
    %s26 = scalar_select %p25, 0, %s24
    %s27 = sadd.s32 1, %s18
    %s28 = scalar_select %p25, %s27, %s18
    %p29 = scmp.ge.s32.totalorder %s28, 2
    %s30 = scalar_select %p29, 0, %s28
    %s31 = ssub.s32 %s19, %s26
    %p32 = scmp.eq.s32.totalorder %s31, 0
    %s34 = sadd.s32 %s33, 1
    %s35 = scalar_select %p32, %s33, %s34
    %p38 = pneg %p32
    %p39 = scmp.eq.s32.totalorder %s11, 1
    %p40 = por %p38, %p39
    %p41 = scmp.ne.s32.totalorder %s33, %s36
    %p42 = scmp.eq.s32.totalorder %s11, 0
    %p43 = por %p41, %p42
    %p44 = scmp.ne.s32.totalorder %s33, %s36
    %p45 = scmp.eq.s32.totalorder %s16, 1
    %p46 = por %p44, %p45
    %p47 = scmp.ne.s32.totalorder %s36, %s37
    %p48 = scmp.eq.s32.totalorder %s16, 0
    %p49 = por %p47, %p48
    %p50 = scmp.ne.s32.totalorder %s36, %s37
    %p51 = scmp.eq.s32.totalorder %s17, 1
    %p52 = por %p50, %p51
    %p54 = scmp.ne.s32.totalorder %s37, %s53
    %p55 = scmp.eq.s32.totalorder %s17, 0
    %p56 = por %p54, %p55
    %s57 = ssub.s32 %s19, %s26
    %s58 = ssub.s32 %s18, %s30
    %s59 = sor.u32 %s57, %s58
    %p60 = scmp.eq.s32.totalorder %s59, 0
    %s62 = sadd.s32 %s61, 1
    %s63 = scalar_select %p60, %s61, %s62
    %p66 = pneg %p60
    %p67 = scmp.eq.s32.totalorder %s11, 1
    %p68 = por %p66, %p67
    %p69 = scmp.ne.s32.totalorder %s61, %s64
    %p70 = scmp.eq.s32.totalorder %s11, 0
    %p71 = por %p69, %p70
    %p72 = scmp.ne.s32.totalorder %s61, %s64
    %p73 = scmp.eq.s32.totalorder %s16, 1
    %p74 = por %p72, %p73
    %p75 = scmp.ne.s32.totalorder %s64, %s65
    %p76 = scmp.eq.s32.totalorder %s16, 0
    %p77 = por %p75, %p76
    %p78 = scmp.ne.s32.totalorder %s64, %s65
    %p79 = scmp.eq.s32.totalorder %s17, 1
    %p80 = por %p78, %p79
    %p82 = scmp.ne.s32.totalorder %s65, %s81
    %p83 = scmp.eq.s32.totalorder %s17, 0
    %p84 = por %p82, %p83
    %s86 = sadd.s32 %s85, 1
    %p89 = scmp.eq.s32.totalorder %s11, 1
    %p90 = scmp.ne.s32.totalorder %s85, %s87
    %p91 = scmp.eq.s32.totalorder %s11, 0
    %p92 = por %p90, %p91
    %p93 = scmp.ne.s32.totalorder %s85, %s87
    %p94 = scmp.eq.s32.totalorder %s16, 1
    %p95 = por %p93, %p94
    %p96 = scmp.ne.s32.totalorder %s87, %s88
    %p97 = scmp.eq.s32.totalorder %s16, 0
    %p98 = por %p96, %p97
    %p99 = scmp.ne.s32.totalorder %s87, %s88
    %p100 = scmp.eq.s32.totalorder %s17, 1
    %p101 = por %p99, %p100
    %p103 = scmp.ne.s32.totalorder %s88, %s102
    %p104 = scmp.eq.s32.totalorder %s17, 0
    %p105 = por %p103, %p104
    %s106 = ssub.s32 %s18, %s30
    %p107 = scmp.eq.s32.totalorder %s106, 0
    %s109 = sadd.s32 %s108, 1
    %s110 = scalar_select %p107, %s108, %s109
    %p113 = pneg %p107
    %p114 = scmp.eq.s32.totalorder %s11, 1
    %p115 = por %p113, %p114
    %p116 = scmp.ne.s32.totalorder %s108, %s111
    %p117 = scmp.eq.s32.totalorder %s11, 0
    %p118 = por %p116, %p117
    %p119 = scmp.ne.s32.totalorder %s108, %s111
    %p120 = scmp.eq.s32.totalorder %s16, 1
    %p121 = por %p119, %p120
    %p122 = scmp.ne.s32.totalorder %s111, %s112
    %p123 = scmp.eq.s32.totalorder %s16, 0
    %p124 = por %p122, %p123
    %p125 = scmp.ne.s32.totalorder %s111, %s112
    %p126 = scmp.eq.s32.totalorder %s17, 1
    %p127 = por %p125, %p126
    %p129 = scmp.ne.s32.totalorder %s112, %s128
    %p130 = scmp.eq.s32.totalorder %s17, 0
    %p131 = por %p129, %p130
    %s133 = sadd.s32 %s132, 1
    %p136 = scmp.eq.s32.totalorder %s11, 1
    %p137 = scmp.ne.s32.totalorder %s132, %s134
    %p138 = scmp.eq.s32.totalorder %s11, 0
    %p139 = por %p137, %p138
    %p140 = scmp.ne.s32.totalorder %s132, %s134
    %p141 = scmp.eq.s32.totalorder %s16, 1
    %p142 = por %p140, %p141
    %p143 = scmp.ne.s32.totalorder %s134, %s135
    %p144 = scmp.eq.s32.totalorder %s16, 0
    %p145 = por %p143, %p144
    %p146 = scmp.ne.s32.totalorder %s134, %s135
    %p147 = scmp.eq.s32.totalorder %s17, 1
    %p148 = por %p146, %p147
    %p150 = scmp.ne.s32.totalorder %s135, %s149
    %p151 = scmp.eq.s32.totalorder %s17, 0
    %p152 = por %p150, %p151
    %s153 = ssub.s32 %s18, %s30
    %p154 = scmp.eq.s32.totalorder %s153, 0
    %s156 = sadd.s32 %s155, 1
    %s157 = scalar_select %p154, %s155, %s156
    %p160 = pneg %p154
    %p161 = scmp.eq.s32.totalorder %s11, 1
    %p162 = por %p160, %p161
    %p163 = scmp.ne.s32.totalorder %s155, %s158
    %p164 = scmp.eq.s32.totalorder %s11, 0
    %p165 = por %p163, %p164
    %p166 = scmp.ne.s32.totalorder %s155, %s158
    %p167 = scmp.eq.s32.totalorder %s16, 1
    %p168 = por %p166, %p167
    %p169 = scmp.ne.s32.totalorder %s158, %s159
    %p170 = scmp.eq.s32.totalorder %s16, 0
    %p171 = por %p169, %p170
    %p172 = scmp.ne.s32.totalorder %s158, %s159
    %p173 = scmp.eq.s32.totalorder %s17, 1
    %p174 = por %p172, %p173
    %p176 = scmp.ne.s32.totalorder %s159, %s175
    %p177 = scmp.eq.s32.totalorder %s17, 0
    %p178 = por %p176, %p177
    %p179 = scmp.le.s32.totalorder 1, %s11
    %p180 = scmp.lt.s32.totalorder %s11, 3
    %p181 = pnand %p179, %p180
    %p182 = pneg %p181
    // Predicated region
    $region9: #{a_call__.5} parent=5 // pred_check
      _
    $region10: #{a_call__.5} parent=5 // pred_check_branch
      %184 = sbr.rel (%p181) target = $region12
    $region11: #{a_call__.5} parent=5 // pred_region
      %s185 = ssub.s32 %s11, 1
      // Predicated region
      $region13: #{a_call__.5} parent=11 // pred_check
        %p186 = pneg %p49
      $region14: #{a_call__.5} parent=11 // pred_check_branch
        %188 = sbr.rel (%p186) target = $region16
      $region15: #{a_call__.5} parent=11 // pred_region
        %p189 = scmp.lt.s32.totalorder %s21, 0
        %s190 = scalar_select %p189, %s21, 0
        %s191 = scalar_lea.vmem %s0, %s190
      $region16: #{a_call__.5} parent=11 // pred_fallthru
        _
      // Predicated region
      $region17: #{a_call__.5} parent=11 // pred_check
        %p192 = pneg %p98
      $region18: #{a_call__.5} parent=11 // pred_check_branch
        %194 = sbr.rel (%p192) target = $region20
      $region19: #{a_call__.5} parent=11 // pred_region
        _
      $region20: #{a_call__.5} parent=11 // pred_fallthru
        _
      // Predicated region
      $region21: #{a_call__.5} parent=11 // pred_check
        %p195 = pneg %p145
      $region22: #{a_call__.5} parent=11 // pred_check_branch
        %197 = sbr.rel (%p195) target = $region24
      $region23: #{a_call__.5} parent=11 // pred_region
        _
      $region24: #{a_call__.5} parent=11 // pred_fallthru
        _
    $region12: #{a_call__.5} parent=5 // pred_fallthru
      _
    %p198 = scmp.lt.s32.totalorder %s11, 2
    // Predicated region
    $region25: #{a_call__.5} parent=5 // pred_check
      %p199 = pneg %p198
    $region26: #{a_call__.5} parent=5 // pred_check_branch
      %201 = sbr.rel (%p199) target = $region28
    $region27: #{a_call__.5} parent=5 // pred_region
      // Predicated region
      $region29: #{a_call__.5} parent=27 // pred_check
        %p202 = pneg %p71
      $region30: #{a_call__.5} parent=27 // pred_check_branch
        %204 = sbr.rel (%p202) target = $region32
      $region31: #{a_call__.5} parent=27 // pred_region
        %s205 = smul.u32 4, %s18
        %p206 = scmp.lt.s32.totalorder %s19, 0
        %s207 = scalar_select %p206, %s19, 0
        %p208 = scmp.lt.s32.totalorder %s205, 7
        %s209 = scalar_select %p208, %s205, 7
        %s210 = smul.addr %s207, 8
        %s211 = sadd.s32 %s209, %s210
        %s212 = smul.addr %s211, 8
        %s213 = scalar_lea.vmem %s1, %s212
        %s214 = smul.u32 4, %s18
      $region32: #{a_call__.5} parent=27 // pred_fallthru
        _
      // Predicated region
      $region33: #{a_call__.5} parent=27 // pred_check
        %p215 = pneg %p118
      $region34: #{a_call__.5} parent=27 // pred_check_branch
        %217 = sbr.rel (%p215) target = $region36
      $region35: #{a_call__.5} parent=27 // pred_region
        %p218 = scmp.lt.s32.totalorder %s18, 1
        %s219 = scalar_select %p218, %s18, 1
        %s220 = smul.addr %s219, 8
        %s221 = scalar_lea.vmem %s3, %s220
      $region36: #{a_call__.5} parent=27 // pred_fallthru
        _
    $region28: #{a_call__.5} parent=5 // pred_fallthru
      _
    %p222 = scmp.le.s32.totalorder 1, %s11
    %p223 = scmp.lt.s32.totalorder %s11, 3
    %p224 = pnand %p222, %p223
    %p225 = pneg %p224
    // Predicated region
    $region37: #{a_call__.5} parent=5 // pred_check
      _
    $region38: #{a_call__.5} parent=5 // pred_check_branch
      %227 = sbr.rel (%p224) target = $region40
    $region39: #{a_call__.5} parent=5 // pred_region
      %s228 = ssub.s32 %s11, 1
      %p229 = scmp.lt.s32.totalorder %s21, 0
      %s230 = scalar_select %p229, %s21, 0
      %s231 = scalar_lea.vmem %s0, %s230
      %p232 = pneg %p49
      %p233 = pneg %p46
      %s234 = smul.u32 4, %s20
      %p235 = scmp.lt.s32.totalorder %s21, 0
      %s236 = scalar_select %p235, %s21, 0
      %p237 = scmp.lt.s32.totalorder %s234, 7
      %s238 = scalar_select %p237, %s234, 7
      %s239 = smul.addr %s236, 8
      %s240 = sadd.s32 %s238, %s239
      %s241 = smul.addr %s240, 8
      %s242 = scalar_lea.vmem %s1, %s241
      %p243 = pneg %p77
      %p244 = pneg %p74
      %p245 = pneg %p98
      %p246 = pneg %p95
      %p247 = scmp.lt.s32.totalorder %s20, 1
      %s248 = scalar_select %p247, %s20, 1
      %s249 = smul.addr %s248, 8
      %s250 = scalar_lea.vmem %s3, %s249
      %p251 = pneg %p124
      %p252 = pneg %p121
      %p253 = pneg %p145
      %p254 = pneg %p142
      %p255 = pneg %p171
      %p256 = pneg %p168
      %s257 = smul.u32 4, %s20
      %p258 = scmp.lt.s32.totalorder %s257, 7
      %s259 = scalar_select %p258, %s257, 7
      %s260 = smul.addr %s259, 8
      %s261 = scalar_lea.vmem %s5, %s260
      %p262 = scmp.lt.s32.totalorder %s21, 0
      %s263 = scalar_select %p262, %s21, 0
      %s264 = scalar_lea.vmem %s0, %s263
      %s265 = smul.u32 4, %s20
      %p266 = scmp.lt.s32.totalorder %s21, 0
      %s267 = scalar_select %p266, %s21, 0
      %p268 = scmp.lt.s32.totalorder %s265, 7
      %s269 = scalar_select %p268, %s265, 7
      %s270 = smul.addr %s267, 8
      %s271 = sadd.s32 %s269, %s270
      %s272 = smul.addr %s271, 8
      %s273 = scalar_lea.vmem %s1, %s272
      %s274 = smul.u32 4, %s20
      %p275 = scmp.lt.s32.totalorder %s20, 1
      %s276 = scalar_select %p275, %s20, 1
      %s277 = smul.addr %s276, 8
      %s278 = scalar_lea.vmem %s3, %s277
      %s279 = smul.u32 4, %s20
      %p280 = scmp.lt.s32.totalorder %s279, 7
      %s281 = scalar_select %p280, %s279, 7
      %s282 = smul.addr %s281, 8
      %s283 = scalar_lea.vmem %s5, %s282
      %s284 = smul.u32 4, %s20
      %v288 = vld [vmem:[%s264] sm:$0x1]
      %v289 = vld [vmem:[%s273] sm:$0xff]
      %v290 = vld [vmem:[%s273 + $0x8] sm:$0xff]
      %v291 = vld [vmem:[%s273 + $0x10] sm:$0xff]
      %v292 = vld [vmem:[%s273 + $0x18] sm:$0xff]
      %v293 = vld [vmem:[%s278] sm:$0xff]
      %vm294 = vnez %v293
      %296 = vset.pattern.permute.xlu0 0
      %297 = vperm.xlu0 %296, %v289
      %v298 = vpop.permute.xlu0 %297
      %301 = vset.pattern.permute.xlu0 0
      %302 = vperm.xlu0 %301, %v290
      %v303 = vpop.permute.xlu0 %302
      %306 = vset.pattern.permute.xlu0 0
      %307 = vperm.xlu0 %306, %v291
      %v308 = vpop.permute.xlu0 %307
      %311 = vset.pattern.permute.xlu0 0
      %312 = vperm.xlu0 %311, %v292
      %v313 = vpop.permute.xlu0 %312
      %v316 = vlaneseq
      %v317 = vshrl.u32 %v316, 7
      %v318 = vsub.s32 0, %v317
      %v319 = vrot.slane %v288, %v318
      %v321 = vadd.f32 %v298, %v319
      %v322 = vadd.f32 %v303, %v319
      %v323 = vadd.f32 %v308, %v319
      %v324 = vadd.f32 %v313, %v319
      %v325 = vmul.f32 %v321, 0.2
      %v326 = vmul.f32 %v322, 0.2
      %v327 = vmul.f32 %v323, 0.2
      %v328 = vmul.f32 %v324, 0.2
      %v329 = vmax.f32 %v321, %v325
      %v330 = vmax.f32 %v322, %v326
      %v331 = vmax.f32 %v323, %v327
      %v332 = vmax.f32 %v324, %v328
      %v333 = vsel %vm294, 16843009, 0
      %v334 = vunpack.c.0.s8 %v333
      %v335 = vunpack.c.1.s8 %v333
      %v336 = vunpack.c.2.s8 %v333
      %v337 = vunpack.c.3.s8 %v333
      %v338 = vpack.c.b16 %v334, %v334
      %v339 = vpack.c.b8 %v338, %v338
      %v340 = vpack.c.b16 %v335, %v335
      %v341 = vpack.c.b8 %v340, %v340
      %v342 = vpack.c.b16 %v336, %v336
      %v343 = vpack.c.b8 %v342, %v342
      %v344 = vpack.c.b16 %v337, %v337
      %v345 = vpack.c.b8 %v344, %v344
      %vm346 = vnez %v339
      %vm347 = vnez %v341
      %vm348 = vnez %v343
      %vm349 = vnez %v345
      %v350 = vsel %vm346, 16843009, 0
      %v351 = vsel %vm347, 16843009, 0
      %v352 = vsel %vm348, 16843009, 0
      %v353 = vsel %vm349, 16843009, 0
      %v354 = vunpack.c.0.s8 %v350
      %v355 = vunpack.c.0.s8 %v351
      %v356 = vunpack.c.0.s8 %v352
      %v357 = vunpack.c.0.s8 %v353
      %vm358 = vcmp.ne.s32.totalorder %v354, 0
      %vm359 = vcmp.ne.s32.totalorder %v355, 0
      %vm360 = vcmp.ne.s32.totalorder %v356, 0
      %vm361 = vcmp.ne.s32.totalorder %v357, 0
      %v362 = vsel %vm358, %v329, -1e+30
      %v363 = vsel %vm359, %v330, -1e+30
      %v364 = vsel %vm360, %v331, -1e+30
      %v365 = vsel %vm361, %v332, -1e+30
      %vm366 = vcmask 523264
      %v367 = vsel %vm366, %v362, -inf
      %368 = vmax.xlane.f32.xlu0 %v367
      %v369 = vpop.xlane.xlu0 %368
      %v370 = vsel %vm366, %v363, -inf
      %371 = vmax.xlane.f32.xlu0 %v370
      %v372 = vpop.xlane.xlu0 %371
      %v373 = vsel %vm366, %v364, -inf
      %374 = vmax.xlane.f32.xlu0 %v373
      %v375 = vpop.xlane.xlu0 %374
      %v376 = vsel %vm366, %v365, -inf
      %377 = vmax.xlane.f32.xlu0 %v376
      %v378 = vpop.xlane.xlu0 %377
      %v379 = vsub.f32 %v362, %v369
      %v380 = vsub.f32 %v363, %v372
      %v381 = vsub.f32 %v364, %v375
      %v382 = vsub.f32 %v365, %v378
      %v383 = vmul.f32 %v379, 1.442695
      %v384 = vpow.pop %v383
      %v385 = vmul.f32 %v380, 1.442695
      %v386 = vpow.pop %v385
      %v387 = vmul.f32 %v381, 1.442695
      %v388 = vpow.pop %v387
      %v389 = vmul.f32 %v382, 1.442695
      %v390 = vpow.pop %v389
      %v391 = vsel %vm366, %v384, 0.0
      %392 = vadd.xlane.f32.xlu0 %v391
      %v393 = vpop.xlane.xlu0 %392
      %v394 = vsel %vm366, %v386, 0.0
      %395 = vadd.xlane.f32.xlu0 %v394
      %v396 = vpop.xlane.xlu0 %395
      %v397 = vsel %vm366, %v388, 0.0
      %398 = vadd.xlane.f32.xlu0 %v397
      %v399 = vpop.xlane.xlu0 %398
      %v400 = vsel %vm366, %v390, 0.0
      %401 = vadd.xlane.f32.xlu0 %v400
      %v402 = vpop.xlane.xlu0 %401
      %v403 = vpack.c.bf16 %v386, %v384
      %v404 = vpack.c.bf16 %v390, %v388
      %s405 = smul.u32 %s21, 8
      %s406 = smul.addr %s405, 4
      %s407 = scalar_lea.vmem %s2, %s406
      %v408 = vld [vmem:[%s407] sm:$0xf]
      %v409 = vld [vmem:[%s407 + $0x4] sm:$0xf]
      %v410 = vld [vmem:[%s407 + $0x8] sm:$0xf]
      %v411 = vld [vmem:[%s407 + $0xc] sm:$0xf]
      %v412 = vld [vmem:[%s407 + $0x10] sm:$0xf]
      %v413 = vld [vmem:[%s407 + $0x14] sm:$0xf]
      %v414 = vld [vmem:[%s407 + $0x18] sm:$0xf]
      %v415 = vld [vmem:[%s407 + $0x1c] sm:$0xf]
      %v424 = vunpack.c.l.b16 %v408
      %v425 = vunpack.c.l.b16 %v409
      %v426 = vunpack.c.l.b16 %v410
      %v427 = vunpack.c.l.b16 %v411
      %v428 = vunpack.c.l.b16 %v412
      %v429 = vunpack.c.l.b16 %v413
      %v430 = vunpack.c.l.b16 %v414
      %v431 = vunpack.c.l.b16 %v415
      %v432 = vpack.c.b16 %v425, %v424
      %v433 = vpack.c.b16 %v427, %v426
      %v434 = vpack.c.b16 %v429, %v428
      %v435 = vpack.c.b16 %v431, %v430
      %v441 = vsel %vm366, %v403, 0
      %v444 = vsel %vm366, %v404, 0
      %446 = vmatprep.subr.bf16.mxu0 0
      %447 = vmatpush1.bf16.msra.mxu0 %v432
      %448 = vmatprep.subr.bf16.mxu0 0
      %449 = vmatpush1.bf16.msra.mxu0 %v433
      %450 = vmatprep.subr.bf16.mxu0 0
      %451 = vmatpush1.bf16.msra.mxu0 %v434
      %452 = vmatprep.subr.bf16.mxu0 0
      %453 = vmatpush1.bf16.msra.mxu0 %v435
      %454 = vmatprep.subr.bf16.mxu0 0
      %455 = vmatpush1.bf16.msra.mxu0 0
      %456 = vmatprep.subr.bf16.mxu0 0
      %457 = vmatpush1.bf16.msra.mxu0 0
      %458 = vmatprep.subr.bf16.mxu0 0
      %459 = vmatpush1.bf16.msra.mxu0 0
      %460 = vmatprep.subr.bf16.mxu0 0
      %461 = vmatpush1.bf16.msra.mxu0 0
      %462 = vmatprep.subr.bf16.mxu0 0
      %463 = vmatpush1.bf16.msra.mxu0 0
      %464 = vmatprep.subr.bf16.mxu0 0
      %465 = vmatpush1.bf16.msra.mxu0 0
      %466 = vmatprep.subr.bf16.mxu0 0
      %467 = vmatpush1.bf16.msra.mxu0 0
      %468 = vmatprep.subr.bf16.mxu0 0
      %469 = vmatpush1.bf16.msra.mxu0 0
      %470 = vmatprep.subr.bf16.mxu0 0
      %471 = vmatpush1.bf16.msra.mxu0 0
      %472 = vmatprep.subr.bf16.mxu0 0
      %473 = vmatpush1.bf16.msra.mxu0 0
      %474 = vmatprep.subr.bf16.mxu0 0
      %475 = vmatpush1.bf16.msra.mxu0 0
      %476 = vmatprep.subr.bf16.mxu0 0
      %477 = vmatpush1.bf16.msra.mxu0 0
      %478 = vmatprep.mubr.bf16.mxu0 0
      %479 = vmatmul.mubr.bf16.gmra.mrb[0].mxu0 %v441
      %v480 = vpop.f32.mrb[0].mxu0
      %v481 = vadd.f32 0.0, %v480
      %v482 = vpop.f32.mrb[0].mxu0
      %v483 = vpop.f32.mrb[0].mxu0
      %v484 = vadd.f32 0.0, %v483
      %v485 = vpop.f32.mrb[0].mxu0
      %486 = vmatprep.mubr.bf16.mxu0 0
      %487 = vmatmul.mubr.bf16.gmra.mrb[0].mxu0 %v444
      %v488 = vpop.f32.mrb[0].mxu0
      %v489 = vadd.f32 0.0, %v488
      %v490 = vpop.f32.mrb[0].mxu0
      %v491 = vpop.f32.mrb[0].mxu0
      %v492 = vadd.f32 0.0, %v491
      %v493 = vpop.f32.mrb[0].mxu0
      %494 = vdwg.mxu0
      %v495 = vmax.f32 %v393, 1e-20
      %v496 = vmax.f32 %v396, 1e-20
      %v497 = vmax.f32 %v399, 1e-20
      %v498 = vmax.f32 %v402, 1e-20
      %v499 = vrcp.pop %v495
      %v500 = vrcp.pop %v496
      %v501 = vrcp.pop %v497
      %v502 = vrcp.pop %v498
      %v503 = vmul.f32 %v481, %v499
      %v504 = vmul.f32 %v484, %v500
      %v505 = vmul.f32 %v489, %v501
      %v506 = vmul.f32 %v492, %v502
      %p507 = scmp.eq.s32.totalorder %s21, 0
      // Predicated region
      $region41: #{a_call__.5} parent=39 // pred_check
        %p508 = pneg %p507
      $region42: #{a_call__.5} parent=39 // pred_check_branch
        %510 = sbr.rel (%p508) target = $region44
      $region43: #{a_call__.5} parent=39 // pred_region
        %511 = vst [vmem:[%s283] sm:$0xff] %v503
        %512 = vst [vmem:[%s283 + $0x8] sm:$0xff] %v504
        %513 = vst [vmem:[%s283 + $0x10] sm:$0xff] %v505
        %514 = vst [vmem:[%s283 + $0x18] sm:$0xff] %v506
      $region44: #{a_call__.5} parent=39 // pred_fallthru
        _
      %p515 = scmp.gt.s32.totalorder %s21, 0
      // Predicated region
      $region45: #{a_call__.5} parent=39 // pred_check
        %p516 = pneg %p515
      $region46: #{a_call__.5} parent=39 // pred_check_branch
        %518 = sbr.rel (%p516) target = $region48
      $region47: #{a_call__.5} parent=39 // pred_region
        %v519 = vld [vmem:[%s283] sm:$0xff]
        %v520 = vld [vmem:[%s283 + $0x8] sm:$0xff]
        %v521 = vld [vmem:[%s283 + $0x10] sm:$0xff]
        %v522 = vld [vmem:[%s283 + $0x18] sm:$0xff]
        %v523 = vadd.f32 %v519, %v503
        %v524 = vadd.f32 %v520, %v504
        %v525 = vadd.f32 %v521, %v505
        %v526 = vadd.f32 %v522, %v506
        %527 = vst [vmem:[%s283] sm:$0xff] %v523
        %528 = vst [vmem:[%s283 + $0x8] sm:$0xff] %v524
        %529 = vst [vmem:[%s283 + $0x10] sm:$0xff] %v525
        %530 = vst [vmem:[%s283 + $0x18] sm:$0xff] %v526
      $region48: #{a_call__.5} parent=39 // pred_fallthru
        _
      // Predicated region
      $region49: #{a_call__.5} parent=39 // pred_check
        %p531 = pneg %p507
      $region50: #{a_call__.5} parent=39 // pred_check_branch
        %533 = sbr.rel (%p531) target = $region52
      $region51: #{a_call__.5} parent=39 // pred_region
        %v534 = vld [vmem:[%s283] sm:$0xff]
        %v535 = vld [vmem:[%s283 + $0x8] sm:$0xff]
        %v536 = vld [vmem:[%s283 + $0x10] sm:$0xff]
        %v537 = vld [vmem:[%s283 + $0x18] sm:$0xff]
        %v538 = vld [vmem:[%s4] sm:$0x1]
        %v540 = vlaneseq
        %v541 = vshrl.u32 %v540, 7
        %v542 = vsub.s32 0, %v541
        %v543 = vrot.slane %v538, %v542
        %v545 = vadd.f32 %v534, %v543
        %v546 = vadd.f32 %v535, %v543
        %v547 = vadd.f32 %v536, %v543
        %v548 = vadd.f32 %v537, %v543
        %v549 = vlaneseq
        %v550 = vand.u32 %v549, 127
        %vm551 = vcmp.lt.s32.totalorder %v550, 4
        %v552 = vsel %vm551, %v545, -1e+30
        %v553 = vsel %vm551, %v546, -1e+30
        %v554 = vsel %vm551, %v547, -1e+30
        %v555 = vsel %vm551, %v548, -1e+30
        %556 = vmax.xlane.f32.xlu0 %v552
        %v557 = vpop.xlane.xlu0 %556
        %558 = vmax.xlane.f32.xlu0 %v553
        %v559 = vpop.xlane.xlu0 %558
        %560 = vmax.xlane.f32.xlu0 %v554
        %v561 = vpop.xlane.xlu0 %560
        %562 = vmax.xlane.f32.xlu0 %v555
        %v563 = vpop.xlane.xlu0 %562
        %v564 = vsub.f32 %v552, %v557
        %v565 = vsub.f32 %v553, %v559
        %v566 = vsub.f32 %v554, %v561
        %v567 = vsub.f32 %v555, %v563
        %v568 = vmul.f32 %v564, 1.442695
        %v569 = vpow.pop %v568
        %v570 = vmul.f32 %v565, 1.442695
        %v571 = vpow.pop %v570
        %v572 = vmul.f32 %v566, 1.442695
        %v573 = vpow.pop %v572
        %v574 = vmul.f32 %v567, 1.442695
        %v575 = vpow.pop %v574
        %576 = vadd.xlane.f32.xlu0 %v569
        %v577 = vpop.xlane.xlu0 %576
        %578 = vadd.xlane.f32.xlu0 %v571
        %v579 = vpop.xlane.xlu0 %578
        %580 = vadd.xlane.f32.xlu0 %v573
        %v581 = vpop.xlane.xlu0 %580
        %582 = vadd.xlane.f32.xlu0 %v575
        %v583 = vpop.xlane.xlu0 %582
        %v584 = vlog2.pop %v577
        %v585 = vmul.f32 %v584, 0.6931472
        %v586 = vlog2.pop %v579
        %v587 = vmul.f32 %v586, 0.6931472
        %v588 = vlog2.pop %v581
        %v589 = vmul.f32 %v588, 0.6931472
        %v590 = vlog2.pop %v583
        %v591 = vmul.f32 %v590, 0.6931472
        %v592 = vsub.f32 %v564, %v585
        %v593 = vsub.f32 %v565, %v587
        %v594 = vsub.f32 %v566, %v589
        %v595 = vsub.f32 %v567, %v591
        %596 = vst [vmem:[%s283] sm:$0xff] %v592
        %597 = vst [vmem:[%s283 + $0x8] sm:$0xff] %v593
        %598 = vst [vmem:[%s283 + $0x10] sm:$0xff] %v594
        %599 = vst [vmem:[%s283 + $0x18] sm:$0xff] %v595
      $region52: #{a_call__.5} parent=39 // pred_fallthru
        _
      %s600 = smul.u32 4, %s20
      %p601 = scmp.lt.s32.totalorder %s600, 7
      %s602 = scalar_select %p601, %s600, 7
      %s603 = smul.addr %s602, 8
      %s604 = scalar_lea.vmem %s5, %s603
      // Predicated region
      $region53: #{a_call__.5} parent=39 // pred_check
        %p605 = pneg %p168
      $region54: #{a_call__.5} parent=39 // pred_check_branch
        %607 = sbr.rel (%p605) target = $region56
      $region55: #{a_call__.5} parent=39 // pred_region
        %s608 = smul.u32 4, %s20
      $region56: #{a_call__.5} parent=39 // pred_fallthru
        _
    $region40: #{a_call__.5} parent=5 // pred_fallthru
      _
    %p609 = scmp.le.s32.totalorder 2, %s11
    // Predicated region
    $region57: #{a_call__.5} parent=5 // pred_check
      %p610 = pneg %p609
    $region58: #{a_call__.5} parent=5 // pred_check_branch
      %612 = sbr.rel (%p610) target = $region60
    $region59: #{a_call__.5} parent=5 // pred_region
      %s613 = ssub.s32 %s11, 2
      // Predicated region
      $region61: #{a_call__.5} parent=59 // pred_check
        %p614 = pneg %p174
      $region62: #{a_call__.5} parent=59 // pred_check_branch
        %616 = sbr.rel (%p614) target = $region64
      $region63: #{a_call__.5} parent=59 // pred_region
        %s617 = smul.u32 4, %s22
        %p618 = scmp.lt.s32.totalorder %s617, 7
        %s619 = scalar_select %p618, %s617, 7
        %s620 = smul.addr %s619, 8
        %s621 = scalar_lea.vmem %s5, %s620
      $region64: #{a_call__.5} parent=59 // pred_fallthru
        _
    $region60: #{a_call__.5} parent=5 // pred_fallthru
      _
  $region6: #{a_call__.5} parent=0 // loop_footer
    %s15 = sadd.s32 1, %s11
  $region7: #{a_call__.5} parent=0 // loop_footer_branch
    %10 = sbr.rel target = $region3
  $region8: #{a_call__.5} parent=0 // loop_exit
    _

</llo_original>
